<compile_context>
chip_gen: v5e
topology: v5e:2x2
jax: 0.10.0
libtpu: 0.0.40
codegen_flags: <defaults>
</compile_context>

<pallas_src>
import functools

import jax
import jax.numpy as jnp
from jax.experimental import pallas as pl
from jax.experimental.pallas import tpu as pltpu


def _round_up(x, m):
    return ((x + m - 1) // m) * m


def _vmem_cap_bytes():
    """Physical VMEM per core (falls back to 128 MiB if the query fails)."""
    try:
        return int(getattr(pltpu.get_tpu_info(), "vmem_capacity_bytes", 128 * 2**20))
    except Exception:
        return 128 * 2**20


# ----------------------------------------------------------------------------
# Kernel 1: embedding gather + GRU stack + w1/w2 trunk (single grid step)
# ----------------------------------------------------------------------------
def gru_trunk_kernel(tok_ref, emb_hbm, h_in_ref, w_ih_ref, w_hh_ref,
                     b_ih_ref, b_hh_ref, w1_ref, b1_ref, w2_ref, b2_ref,
                     h_out_ref, h2_ref, x_ref, sem):
    """Shapes (padded; GRU gate order r, z, n, each gate Hp wide):
      tok_ref   (Bp,)  i32 SMEM (scalar prefetch)
      emb_hbm   (V, Dp) f32 HBM (memory_space=ANY, gathered by DMA)
      h_in_ref  (L, Bp, Hp) f32     w_ih_ref (L, Dp, 3Hp) bf16
      w_hh_ref  (L, Hp, 3Hp) bf16   b_ih/b_hh (L, 1, 3Hp) f32
      w1 (Hp, H2p) bf16, b1 (1, H2p) f32, w2 (H2p, H4p) bf16, b2 (1, H4p) f32
      h_out_ref (L, Bp, Hp) f32     h2_ref (Bp, H4p) bf16 (cast once here)
      x_ref     (Bp, Dp) f32 VMEM scratch   sem (Bp,) DMA semaphores
    """
    bf16 = jnp.bfloat16
    n_layers, _, Hp = h_in_ref.shape
    Bp, Dp = x_ref.shape

    # In-kernel embedding gather: one small DMA per (padded) batch row; all
    # started before any wait so they overlap.
    copies = []
    for b in range(Bp):                          # Bp is small & static
        cp = pltpu.make_async_copy(
            emb_hbm.at[pl.ds(tok_ref[b], 1), :],  # (1, Dp) row of the table
            x_ref.at[pl.ds(b, 1), :],
            sem.at[b])
        cp.start()
        copies.append(cp)
    for cp in copies:
        cp.wait()

    h_prev_all = h_in_ref[...]                   # (L, Bp, Hp) f32
    x = x_ref[...]                               # (Bp, Dp) f32
    for l in range(n_layers):                    # static, small
        h = h_prev_all[l]                        # (Bp, Hp)
        if x.shape[1] < Dp:                      # only when Dp > Hp; zero cols
            x = jnp.pad(x, ((0, 0), (0, Dp - x.shape[1])))
        gx = jnp.dot(x.astype(bf16), w_ih_ref[l],
                     preferred_element_type=jnp.float32) + b_ih_ref[l]
        gh = jnp.dot(h.astype(bf16), w_hh_ref[l],
                     preferred_element_type=jnp.float32) + b_hh_ref[l]
        r = jax.nn.sigmoid(gx[:, :Hp] + gh[:, :Hp])
        z = jax.nn.sigmoid(gx[:, Hp:2 * Hp] + gh[:, Hp:2 * Hp])
        n = jnp.tanh(gx[:, 2 * Hp:] + r * gh[:, 2 * Hp:])
        h_new = (1.0 - z) * n + z * h            # f32 elementwise
        h_out_ref[l] = h_new
        x = h_new                                # seq_len = 1

    h1 = jnp.dot(x.astype(bf16), w1_ref[...],
                 preferred_element_type=jnp.float32) + b1_ref[...]
    h2 = jnp.dot(h1.astype(bf16), w2_ref[...],
                 preferred_element_type=jnp.float32) + b2_ref[...]
    h2_ref[...] = h2.astype(h2_ref.dtype)        # single f32 -> bf16 cast


# ----------------------------------------------------------------------------
# Kernel 2: vocab projection, streamed over (H4p, tn) W3 tiles
# ----------------------------------------------------------------------------
def vocab_proj_kernel(h2_ref, w3_ref, b3_ref, pred_ref):
    pred_ref[...] = (
        jnp.dot(h2_ref[...], w3_ref[...], preferred_element_type=jnp.float32)
        + b3_ref[...]
    ).astype(pred_ref.dtype)


# ----------------------------------------------------------------------------
# Parameter packing (pad to (8,128) quanta, gate-wise; matmul weights -> bf16)
# ----------------------------------------------------------------------------
def pack_params(params, n_layers, tn):
    f32, bf16 = jnp.float32, jnp.bfloat16
    emb_tbl = params["embedding"]                       # (V, E) f32
    V, E = emb_tbl.shape
    H = params["gru"][0]["w_hh_t"].shape[0]             # = 2 * hid_dim
    H2 = params["w1_t"].shape[1]
    H4 = params["w2_t"].shape[1]

    Ep, Hp = _round_up(E, 128), _round_up(H, 128)
    Dp = max(Ep, Hp)
    H2p, H4p = _round_up(H2, 128), _round_up(H4, 128)
    Vp = _round_up(V, tn)

    def pad2(a, r, c):
        return jnp.pad(a, ((0, r - a.shape[0]), (0, c - a.shape[1])))

    def pad_gates(w, rp):                               # (d, 3H) -> (rp, 3Hp)
        d, three_h = w.shape
        h = three_h // 3
        gates = [pad2(w[:, g * h:(g + 1) * h], rp, Hp) for g in range(3)]
        return jnp.concatenate(gates, axis=1)

    # All w_ih layers padded to Dp rows (zero rows) so the kernel never slices.
    w_ih = jnp.stack([pad_gates(params["gru"][l]["w_ih_t"], Dp) for l in range(n_layers)])
    w_hh = jnp.stack([pad_gates(params["gru"][l]["w_hh_t"], Hp) for l in range(n_layers)])
    b_ih = jnp.stack([pad_gates(params["gru"][l]["b_ih"], 1) for l in range(n_layers)])
    b_hh = jnp.stack([pad_gates(params["gru"][l]["b_hh"], 1) for l in range(n_layers)])

    return {
        # Embedding pre-padded to Dp columns once; gathered by DMA in-kernel.
        "embedding": pad2(emb_tbl, V, Dp).astype(f32),
        "w_ih": w_ih.astype(bf16), "w_hh": w_hh.astype(bf16),
        "b_ih": b_ih.astype(f32), "b_hh": b_hh.astype(f32),
        "w1": pad2(params["w1_t"], Hp, H2p).astype(bf16),
        "b1": pad2(params["b1"], 1, H2p).astype(f32),
        "w2": pad2(params["w2_t"], H2p, H4p).astype(bf16),
        "b2": pad2(params["b2"], 1, H4p).astype(f32),
        "w3": pad2(params["w3_t"], H4p, Vp).astype(bf16),
        "b3": pad2(params["b3"], 1, Vp).astype(f32),
    }


# ----------------------------------------------------------------------------
# Decoder forward: trunk kernel + streamed vocab-projection kernel
# ----------------------------------------------------------------------------
@functools.partial(jax.jit, static_argnames=("tn",))
def decoder_forward(packed, tok_pad, hidden_pad, *, tn):
    """tok_pad: (Bp,) int32 (zero-padded); hidden_pad: (L, Bp, Hp) f32.
    Returns padded logits (Bp, Vp) and padded new hidden (L, Bp, Hp);
    state stays padded across decode steps (slice once outside the loop)."""
    L, Bp, Hp = hidden_pad.shape
    _, Dp = packed["embedding"].shape
    H2p = packed["w1"].shape[1]
    H4p = packed["w2"].shape[1]
    Vp = packed["w3"].shape[1]
    num_tiles = Vp // tn

    vmem_cap = _vmem_cap_bytes()

    # ---- Kernel 1: GRU + trunk (everything resident; single grid step) ----
    trunk_bytes = (
        2 * (L * Bp * Hp * 4)
        + packed["w_ih"].size * 2 + packed["w_hh"].size * 2
        + (packed["b_ih"].size + packed["b_hh"].size) * 4
        + packed["w1"].size * 2 + packed["b1"].size * 4
        + packed["w2"].size * 2 + packed["b2"].size * 4
        + Bp * Dp * 4 + Bp * H4p * 2
    )
    trunk_vmem = int(min(max(4 * trunk_bytes, 16 * 2**20), int(0.45 * vmem_cap)))

    hidden_new, h2 = pl.pallas_call(
        gru_trunk_kernel,
        out_shape=(
            jax.ShapeDtypeStruct((L, Bp, Hp), jnp.float32),
            jax.ShapeDtypeStruct((Bp, H4p), jnp.bfloat16),
        ),
        grid_spec=pltpu.PrefetchScalarGridSpec(
            num_scalar_prefetch=1,               # token ids -> SMEM
            grid=(1,),
            in_specs=[
                pl.BlockSpec(memory_space=pl.ANY),                       # emb table (HBM)
                pl.BlockSpec((L, Bp, Hp), lambda i, tok: (0, 0, 0)),     # hidden in
                pl.BlockSpec((L, Dp, 3 * Hp), lambda i, tok: (0, 0, 0)),  # w_ih
                pl.BlockSpec((L, Hp, 3 * Hp), lambda i, tok: (0, 0, 0)),  # w_hh
                pl.BlockSpec((L, 1, 3 * Hp), lambda i, tok: (0, 0, 0)),   # b_ih
                pl.BlockSpec((L, 1, 3 * Hp), lambda i, tok: (0, 0, 0)),   # b_hh
                pl.BlockSpec((Hp, H2p), lambda i, tok: (0, 0)),           # w1
                pl.BlockSpec((1, H2p), lambda i, tok: (0, 0)),            # b1
                pl.BlockSpec((H2p, H4p), lambda i, tok: (0, 0)),          # w2
                pl.BlockSpec((1, H4p), lambda i, tok: (0, 0)),            # b2
            ],
            out_specs=[
                pl.BlockSpec((L, Bp, Hp), lambda i, tok: (0, 0, 0)),      # new hidden
                pl.BlockSpec((Bp, H4p), lambda i, tok: (0, 0)),           # h2 (bf16)
            ],
            scratch_shapes=[
                pltpu.VMEM((Bp, Dp), jnp.float32),   # gathered embeddings
                pltpu.SemaphoreType.DMA((Bp,)),      # one sem per gathered row
            ]),
        compiler_params=pltpu.CompilerParams(
            dimension_semantics=("arbitrary",),
            vmem_limit_bytes=trunk_vmem),
    )(tok_pad, packed["embedding"], hidden_pad,
      packed["w_ih"], packed["w_hh"], packed["b_ih"], packed["b_hh"],
      packed["w1"], packed["b1"], packed["w2"], packed["b2"])

    # ---- Kernel 2: vocab projection, W3 streamed as (H4p, tn) tiles ----
    stream_bytes = (
        2 * (H4p * tn * 2 + tn * 4 + Bp * tn * 4)   # double-buffered tiles
        + 2 * (Bp * H4p * 2)                        # resident h2 (tiny)
    )
    vocab_vmem = int(min(max(4 * stream_bytes, 16 * 2**20), int(0.45 * vmem_cap)))

    pred_pad = pl.pallas_call(
        vocab_proj_kernel,
        out_shape=jax.ShapeDtypeStruct((Bp, Vp), jnp.float32),
        grid_spec=pltpu.PrefetchScalarGridSpec(
            num_scalar_prefetch=0,
            grid=(num_tiles,),
            in_specs=[
                pl.BlockSpec((Bp, H4p), lambda j: (0, 0)),   # h2 (bf16, resident)
                pl.BlockSpec((H4p, tn), lambda j: (0, j)),   # w3 tile (streamed)
                pl.BlockSpec((1, tn), lambda j: (0, j)),     # b3 tile
            ],
            out_specs=pl.BlockSpec((Bp, tn), lambda j: (0, j)),
        ),
        compiler_params=pltpu.CompilerParams(
            # "parallel": v7x splits vocab tiles across both TensorCores;
            # harmless on single-core v5e/v6e.
            dimension_semantics=("parallel",),
            vmem_limit_bytes=vocab_vmem),
    )(h2, packed["w3"], packed["b3"])

    return pred_pad, hidden_new


# ----------------------------------------------------------------------------
# Pure-JAX reference (mirrors the kernels' bf16-weight / f32-accumulate math)
# ----------------------------------------------------------------------------
def decoder_forward_ref(params, inputs, hidden):
    bf16 = jnp.bfloat16

    def mm(a, w):
        return jnp.dot(a.astype(bf16), w.astype(bf16),
                       preferred_element_type=jnp.float32)

    x = params["embedding"][inputs]
    new_hidden = []
    for l, layer_p in enumerate(params["gru"]):
        h = hidden[l]
        H = h.shape[-1]
        gx = mm(x, layer_p["w_ih_t"]) + layer_p["b_ih"]
        gh = mm(h, layer_p["w_hh_t"]) + layer_p["b_hh"]
        r = jax.nn.sigmoid(gx[:, :H] + gh[:, :H])
        z = jax.nn.sigmoid(gx[:, H:2 * H] + gh[:, H:2 * H])
        n = jnp.tanh(gx[:, 2 * H:] + r * gh[:, 2 * H:])
        h = (1.0 - z) * n + z * h
        new_hidden.append(h)
        x = h
    out = mm(x, params["w1_t"]) + params["b1"]
    out = mm(out, params["w2_t"]) + params["b2"]
    pred = mm(out, params["w3_t"]) + params["b3"]
    return pred, jnp.stack(new_hidden, axis=0)


# ----------------------------------------------------------------------------
# Deterministic parameter init (shapes follow the nn.Module __init__)
# ----------------------------------------------------------------------------
def init_params(key, cn_vocab_size, emb_dim, hid_dim, n_layers):
    H = hid_dim * 2          # self.hid_dim = hid_dim * 2 in the module
    input_dim = emb_dim      # isatt = False

    def u(k, shape, scale=0.1):
        return jax.random.uniform(k, shape, jnp.float32, -scale, scale)

    keys = iter(jax.random.split(key, 4 + 4 * n_layers + 6))
    params = {"embedding": u(next(keys), (cn_vocab_size, emb_dim))}

    gru = []
    for layer in range(n_layers):
        d_in = input_dim if layer == 0 else H
        gru.append({
            # stored pre-transposed: (in, 3H), gate order r,z,n (PyTorch layout)
            "w_ih_t": u(next(keys), (d_in, 3 * H)),
            "w_hh_t": u(next(keys), (H, 3 * H)),
            "b_ih":   u(next(keys), (1, 3 * H)),
            "b_hh":   u(next(keys), (1, 3 * H)),
        })
    params["gru"] = gru

    params["w1_t"] = u(next(keys), (H, 2 * H))
    params["b1"]   = u(next(keys), (1, 2 * H))
    params["w2_t"] = u(next(keys), (2 * H, 4 * H))
    params["b2"]   = u(next(keys), (1, 4 * H))
    params["w3_t"] = u(next(keys), (4 * H, cn_vocab_size))
    params["b3"]   = u(next(keys), (1, cn_vocab_size))
    return params


if __name__ == "__main__":
    # Small, module-consistent shapes (vocab > tn so the W3 stream has >1 tile).
    cn_vocab_size = 1280
    emb_dim = 16
    hid_dim = 16          # -> GRU / decoder hidden = 32
    n_layers = 2
    batch = 4
    H = hid_dim * 2
    tn = 512              # vocab tile width (multiple of 256) -> 3 tiles here

    key = jax.random.PRNGKey(0)
    k_param, k_tok, k_hid = jax.random.split(key, 3)

    params = init_params(k_param, cn_vocab_size, emb_dim, hid_dim, n_layers)
    packed = pack_params(params, n_layers, tn)

    inputs = jax.random.randint(k_tok, (batch,), 0, cn_vocab_size, dtype=jnp.int32)
    hidden = jax.random.uniform(k_hid, (n_layers, batch, H), jnp.float32, -0.1, 0.1)

    # Pad once (state stays padded across decode steps; slice once at the end).
    Bp = _round_up(batch, 8)
    Hp = packed["w_hh"].shape[1]
    tok_pad = jnp.zeros((Bp,), jnp.int32).at[:batch].set(inputs)
    hidden_pad = jnp.zeros((n_layers, Bp, Hp), jnp.float32).at[:, :batch, :H].set(hidden)

    pred_pad, hid_pad = decoder_forward(packed, tok_pad, hidden_pad, tn=tn)
    jax.block_until_ready((pred_pad, hid_pad))

    prediction = pred_pad[:batch, :cn_vocab_size]
    new_hidden = hid_pad[:, :batch, :H]

    # Correctness check against a pure-JAX reference using identical bf16 math.
    pred_ref, hid_ref = decoder_forward_ref(params, inputs, hidden)
    assert prediction.shape == (batch, cn_vocab_size)
    assert new_hidden.shape == (n_layers, batch, H)
    assert jnp.allclose(prediction, pred_ref, atol=5e-3, rtol=5e-3)
    assert jnp.allclose(new_hidden, hid_ref, atol=5e-3, rtol=5e-3)

    print("KERNEL_OK")
</pallas_src>

<mosaic_0001>
module attributes {stable_mosaic.version = 11 : i64} {
  func.func @vocab_proj_kernel(%arg0: i32, %arg1: memref<8x128xbf16, #tpu.memory_space<vmem>>, %arg2: memref<128x512xbf16, #tpu.memory_space<vmem>>, %arg3: memref<1x512xf32, #tpu.memory_space<vmem>>, %arg4: memref<8x512xf32, #tpu.memory_space<vmem>>) attributes {dimension_semantics = [#tpu.dimension_semantics<parallel>], iteration_bounds = array<i64: 3>, scalar_prefetch = 0 : i64, scratch_operands = 0 : i64, tpu.core_type = #tpu.core_type<tc>, window_params = [{pipeline_mode = #tpu.pipeline_mode<synchronous>, transform_indices = @transform_0, window_bounds = array<i64: 8, 128>}, {transform_indices = @transform_1, window_bounds = array<i64: 128, 512>}, {transform_indices = @transform_2, window_bounds = array<i64: 1, 512>}, {transform_indices = @transform_3, window_bounds = array<i64: 8, 512>}]} {
    %c0 = arith.constant 0 : index
    %c0_0 = arith.constant 0 : index
    %0 = vector.load %arg1[%c0, %c0_0] : memref<8x128xbf16, #tpu.memory_space<vmem>>, vector<8x128xbf16>
    %c0_1 = arith.constant 0 : index
    %c0_2 = arith.constant 0 : index
    %1 = vector.load %arg2[%c0_1, %c0_2] : memref<128x512xbf16, #tpu.memory_space<vmem>>, vector<128x512xbf16>
    %cst = arith.constant dense<0.000000e+00> : vector<8x512xf32>
    %2 = tpu.matmul %0, %1, %cst {dimension_numbers = #tpu.dot_dimension_numbers<[1], [0], [0], [1], [0, 0, 1, 1], [], []>} : vector<8x128xbf16>, vector<128x512xbf16>, vector<8x512xf32> -> vector<8x512xf32>
    %c0_3 = arith.constant 0 : index
    %c0_4 = arith.constant 0 : index
    %3 = vector.load %arg3[%c0_3, %c0_4] : memref<1x512xf32, #tpu.memory_space<vmem>>, vector<1x512xf32>
    %4 = vector.broadcast %3 : vector<1x512xf32> to vector<8x512xf32>
    %5 = arith.addf %2, %4 : vector<8x512xf32>
    %c0_5 = arith.constant 0 : index
    %c0_6 = arith.constant 0 : index
    %6 = vector.load %arg4[%c0_5, %c0_6] : memref<8x512xf32, #tpu.memory_space<vmem>>, vector<8x512xf32>
    tpu.vector_store %arg4[%c0_5, %c0_6], %5 {strides = array<i32>} : memref<8x512xf32, #tpu.memory_space<vmem>>, vector<8x512xf32>,
    return
  }
  func.func @transform_0(%arg0: i32) -> (i32, i32) {
    %c0_i32 = arith.constant 0 : i32
    %c0_i32_0 = arith.constant 0 : i32
    %c0_i32_1 = arith.constant 0 : i32
    return %c0_i32, %c0_i32_0 : i32, i32
  }
  func.func @transform_1(%arg0: i32) -> (i32, i32) {
    %c0_i32 = arith.constant 0 : i32
    %c0_i32_0 = arith.constant 0 : i32
    return %c0_i32, %arg0 : i32, i32
  }
  func.func @transform_2(%arg0: i32) -> (i32, i32) {
    %c0_i32 = arith.constant 0 : i32
    %c0_i32_0 = arith.constant 0 : i32
    return %c0_i32, %arg0 : i32, i32
  }
  func.func @transform_3(%arg0: i32) -> (i32, i32) {
    %c0_i32 = arith.constant 0 : i32
    %c0_i32_0 = arith.constant 0 : i32
    return %c0_i32, %arg0 : i32, i32
  }
}

module attributes {stable_mosaic.version = 11 : i64} {
  func.func @gru_trunk_kernel(%arg0: i32, %arg1: memref<8xi32, #tpu.memory_space<smem>>, %arg2: memref<1280x128xf32, #tpu.memory_space<any>>, %arg3: memref<2x8x128xf32, #tpu.memory_space<vmem>>, %arg4: memref<2x128x384xbf16, #tpu.memory_space<vmem>>, %arg5: memref<2x128x384xbf16, #tpu.memory_space<vmem>>, %arg6: memref<2x1x384xf32, #tpu.memory_space<vmem>>, %arg7: memref<2x1x384xf32, #tpu.memory_space<vmem>>, %arg8: memref<128x128xbf16, #tpu.memory_space<vmem>>, %arg9: memref<1x128xf32, #tpu.memory_space<vmem>>, %arg10: memref<128x128xbf16, #tpu.memory_space<vmem>>, %arg11: memref<1x128xf32, #tpu.memory_space<vmem>>, %arg12: memref<2x8x128xf32, #tpu.memory_space<vmem>>, %arg13: memref<8x128xbf16, #tpu.memory_space<vmem>>, %arg14: memref<8x128xf32, #tpu.memory_space<vmem>>, %arg15: memref<8x!tpu.dma_semaphore, #tpu.memory_space<semaphore_mem>>) attributes {dimension_semantics = [#tpu.dimension_semantics<arbitrary>], iteration_bounds = array<i64: 1>, scalar_prefetch = 1 : i64, scratch_operands = 2 : i64, tpu.core_type = #tpu.core_type<tc>, window_params = [{}, {pipeline_mode = #tpu.pipeline_mode<synchronous>, transform_indices = @transform_1, window_bounds = array<i64: 2, 8, 128>}, {pipeline_mode = #tpu.pipeline_mode<synchronous>, transform_indices = @transform_2, window_bounds = array<i64: 2, 128, 384>}, {pipeline_mode = #tpu.pipeline_mode<synchronous>, transform_indices = @transform_3, window_bounds = array<i64: 2, 128, 384>}, {pipeline_mode = #tpu.pipeline_mode<synchronous>, transform_indices = @transform_4, window_bounds = array<i64: 2, 1, 384>}, {pipeline_mode = #tpu.pipeline_mode<synchronous>, transform_indices = @transform_5, window_bounds = array<i64: 2, 1, 384>}, {pipeline_mode = #tpu.pipeline_mode<synchronous>, transform_indices = @transform_6, window_bounds = array<i64: 128, 128>}, {pipeline_mode = #tpu.pipeline_mode<synchronous>, transform_indices = @transform_7, window_bounds = array<i64: 1, 128>}, {pipeline_mode = #tpu.pipeline_mode<synchronous>, transform_indices = @transform_8, window_bounds = array<i64: 128, 128>}, {pipeline_mode = #tpu.pipeline_mode<synchronous>, transform_indices = @transform_9, window_bounds = array<i64: 1, 128>}, {pipeline_mode = #tpu.pipeline_mode<synchronous>, transform_indices = @transform_10, window_bounds = array<i64: 2, 8, 128>}, {pipeline_mode = #tpu.pipeline_mode<synchronous>, transform_indices = @transform_11, window_bounds = array<i64: 8, 128>}]} {
    %c0 = arith.constant 0 : index
    %0 = memref.load %arg1[%c0] : memref<8xi32, #tpu.memory_space<smem>>
    %c0_i32 = arith.constant 0 : i32
    %c0_i32_0 = arith.constant 0 : i32
    %1 = tpu.memref_slice %arg2[%0, %c0_i32_0] : memref<1280x128xf32, #tpu.memory_space<any>> -> memref<1x128xf32, #tpu.memory_space<any>>
    %c0_i32_1 = arith.constant 0 : i32
    %c0_i32_2 = arith.constant 0 : i32
    %2 = tpu.memref_slice %arg14[%c0_i32_1, %c0_i32_2] : memref<8x128xf32, #tpu.memory_space<vmem>> -> memref<1x128xf32, #tpu.memory_space<vmem>>
    %3 = tpu.memref_slice %arg15[%c0_i32] : memref<8x!tpu.dma_semaphore, #tpu.memory_space<semaphore_mem>> -> memref<1x!tpu.dma_semaphore, #tpu.memory_space<semaphore_mem>>
    %4 = tpu.memref_squeeze %3 : memref<1x!tpu.dma_semaphore, #tpu.memory_space<semaphore_mem>> -> memref<!tpu.dma_semaphore, #tpu.memory_space<semaphore_mem>>
    tpu.enqueue_dma source(%1 : memref<1x128xf32, #tpu.memory_space<any>>) target(%2 : memref<1x128xf32, #tpu.memory_space<vmem>>) target_semaphore(%4 : memref<!tpu.dma_semaphore, #tpu.memory_space<semaphore_mem>>)
    %c1 = arith.constant 1 : index
    %5 = memref.load %arg1[%c1] : memref<8xi32, #tpu.memory_space<smem>>
    %c1_i32 = arith.constant 1 : i32
    %c0_i32_3 = arith.constant 0 : i32
    %6 = tpu.memref_slice %arg2[%5, %c0_i32_3] : memref<1280x128xf32, #tpu.memory_space<any>> -> memref<1x128xf32, #tpu.memory_space<any>>
    %c1_i32_4 = arith.constant 1 : i32
    %c0_i32_5 = arith.constant 0 : i32
    %7 = tpu.memref_slice %arg14[%c1_i32_4, %c0_i32_5] : memref<8x128xf32, #tpu.memory_space<vmem>> -> memref<1x128xf32, #tpu.memory_space<vmem>>
    %8 = tpu.memref_slice %arg15[%c1_i32] : memref<8x!tpu.dma_semaphore, #tpu.memory_space<semaphore_mem>> -> memref<1x!tpu.dma_semaphore, #tpu.memory_space<semaphore_mem>>
    %9 = tpu.memref_squeeze %8 : memref<1x!tpu.dma_semaphore, #tpu.memory_space<semaphore_mem>> -> memref<!tpu.dma_semaphore, #tpu.memory_space<semaphore_mem>>
    tpu.enqueue_dma source(%6 : memref<1x128xf32, #tpu.memory_space<any>>) target(%7 : memref<1x128xf32, #tpu.memory_space<vmem>>) target_semaphore(%9 : memref<!tpu.dma_semaphore, #tpu.memory_space<semaphore_mem>>)
    %c2 = arith.constant 2 : index
    %10 = memref.load %arg1[%c2] : memref<8xi32, #tpu.memory_space<smem>>
    %c2_i32 = arith.constant 2 : i32
    %c0_i32_6 = arith.constant 0 : i32
    %11 = tpu.memref_slice %arg2[%10, %c0_i32_6] : memref<1280x128xf32, #tpu.memory_space<any>> -> memref<1x128xf32, #tpu.memory_space<any>>
    %c2_i32_7 = arith.constant 2 : i32
    %c0_i32_8 = arith.constant 0 : i32
    %12 = tpu.memref_slice %arg14[%c2_i32_7, %c0_i32_8] : memref<8x128xf32, #tpu.memory_space<vmem>> -> memref<1x128xf32, #tpu.memory_space<vmem>>
    %13 = tpu.memref_slice %arg15[%c2_i32] : memref<8x!tpu.dma_semaphore, #tpu.memory_space<semaphore_mem>> -> memref<1x!tpu.dma_semaphore, #tpu.memory_space<semaphore_mem>>
    %14 = tpu.memref_squeeze %13 : memref<1x!tpu.dma_semaphore, #tpu.memory_space<semaphore_mem>> -> memref<!tpu.dma_semaphore, #tpu.memory_space<semaphore_mem>>
    tpu.enqueue_dma source(%11 : memref<1x128xf32, #tpu.memory_space<any>>) target(%12 : memref<1x128xf32, #tpu.memory_space<vmem>>) target_semaphore(%14 : memref<!tpu.dma_semaphore, #tpu.memory_space<semaphore_mem>>)
    %c3 = arith.constant 3 : index
    %15 = memref.load %arg1[%c3] : memref<8xi32, #tpu.memory_space<smem>>
    %c3_i32 = arith.constant 3 : i32
    %c0_i32_9 = arith.constant 0 : i32
    %16 = tpu.memref_slice %arg2[%15, %c0_i32_9] : memref<1280x128xf32, #tpu.memory_space<any>> -> memref<1x128xf32, #tpu.memory_space<any>>
    %c3_i32_10 = arith.constant 3 : i32
    %c0_i32_11 = arith.constant 0 : i32
    %17 = tpu.memref_slice %arg14[%c3_i32_10, %c0_i32_11] : memref<8x128xf32, #tpu.memory_space<vmem>> -> memref<1x128xf32, #tpu.memory_space<vmem>>
    %18 = tpu.memref_slice %arg15[%c3_i32] : memref<8x!tpu.dma_semaphore, #tpu.memory_space<semaphore_mem>> -> memref<1x!tpu.dma_semaphore, #tpu.memory_space<semaphore_mem>>
    %19 = tpu.memref_squeeze %18 : memref<1x!tpu.dma_semaphore, #tpu.memory_space<semaphore_mem>> -> memref<!tpu.dma_semaphore, #tpu.memory_space<semaphore_mem>>
    tpu.enqueue_dma source(%16 : memref<1x128xf32, #tpu.memory_space<any>>) target(%17 : memref<1x128xf32, #tpu.memory_space<vmem>>) target_semaphore(%19 : memref<!tpu.dma_semaphore, #tpu.memory_space<semaphore_mem>>)
    %c4 = arith.constant 4 : index
    %20 = memref.load %arg1[%c4] : memref<8xi32, #tpu.memory_space<smem>>
    %c4_i32 = arith.constant 4 : i32
    %c0_i32_12 = arith.constant 0 : i32
    %21 = tpu.memref_slice %arg2[%20, %c0_i32_12] : memref<1280x128xf32, #tpu.memory_space<any>> -> memref<1x128xf32, #tpu.memory_space<any>>
    %c4_i32_13 = arith.constant 4 : i32
    %c0_i32_14 = arith.constant 0 : i32
    %22 = tpu.memref_slice %arg14[%c4_i32_13, %c0_i32_14] : memref<8x128xf32, #tpu.memory_space<vmem>> -> memref<1x128xf32, #tpu.memory_space<vmem>>
    %23 = tpu.memref_slice %arg15[%c4_i32] : memref<8x!tpu.dma_semaphore, #tpu.memory_space<semaphore_mem>> -> memref<1x!tpu.dma_semaphore, #tpu.memory_space<semaphore_mem>>
    %24 = tpu.memref_squeeze %23 : memref<1x!tpu.dma_semaphore, #tpu.memory_space<semaphore_mem>> -> memref<!tpu.dma_semaphore, #tpu.memory_space<semaphore_mem>>
    tpu.enqueue_dma source(%21 : memref<1x128xf32, #tpu.memory_space<any>>) target(%22 : memref<1x128xf32, #tpu.memory_space<vmem>>) target_semaphore(%24 : memref<!tpu.dma_semaphore, #tpu.memory_space<semaphore_mem>>)
    %c5 = arith.constant 5 : index
    %25 = memref.load %arg1[%c5] : memref<8xi32, #tpu.memory_space<smem>>
    %c5_i32 = arith.constant 5 : i32
    %c0_i32_15 = arith.constant 0 : i32
    %26 = tpu.memref_slice %arg2[%25, %c0_i32_15] : memref<1280x128xf32, #tpu.memory_space<any>> -> memref<1x128xf32, #tpu.memory_space<any>>
    %c5_i32_16 = arith.constant 5 : i32
    %c0_i32_17 = arith.constant 0 : i32
    %27 = tpu.memref_slice %arg14[%c5_i32_16, %c0_i32_17] : memref<8x128xf32, #tpu.memory_space<vmem>> -> memref<1x128xf32, #tpu.memory_space<vmem>>
    %28 = tpu.memref_slice %arg15[%c5_i32] : memref<8x!tpu.dma_semaphore, #tpu.memory_space<semaphore_mem>> -> memref<1x!tpu.dma_semaphore, #tpu.memory_space<semaphore_mem>>
    %29 = tpu.memref_squeeze %28 : memref<1x!tpu.dma_semaphore, #tpu.memory_space<semaphore_mem>> -> memref<!tpu.dma_semaphore, #tpu.memory_space<semaphore_mem>>
    tpu.enqueue_dma source(%26 : memref<1x128xf32, #tpu.memory_space<any>>) target(%27 : memref<1x128xf32, #tpu.memory_space<vmem>>) target_semaphore(%29 : memref<!tpu.dma_semaphore, #tpu.memory_space<semaphore_mem>>)
    %c6 = arith.constant 6 : index
    %30 = memref.load %arg1[%c6] : memref<8xi32, #tpu.memory_space<smem>>
    %c6_i32 = arith.constant 6 : i32
    %c0_i32_18 = arith.constant 0 : i32
    %31 = tpu.memref_slice %arg2[%30, %c0_i32_18] : memref<1280x128xf32, #tpu.memory_space<any>> -> memref<1x128xf32, #tpu.memory_space<any>>
    %c6_i32_19 = arith.constant 6 : i32
    %c0_i32_20 = arith.constant 0 : i32
    %32 = tpu.memref_slice %arg14[%c6_i32_19, %c0_i32_20] : memref<8x128xf32, #tpu.memory_space<vmem>> -> memref<1x128xf32, #tpu.memory_space<vmem>>
    %33 = tpu.memref_slice %arg15[%c6_i32] : memref<8x!tpu.dma_semaphore, #tpu.memory_space<semaphore_mem>> -> memref<1x!tpu.dma_semaphore, #tpu.memory_space<semaphore_mem>>
    %34 = tpu.memref_squeeze %33 : memref<1x!tpu.dma_semaphore, #tpu.memory_space<semaphore_mem>> -> memref<!tpu.dma_semaphore, #tpu.memory_space<semaphore_mem>>
    tpu.enqueue_dma source(%31 : memref<1x128xf32, #tpu.memory_space<any>>) target(%32 : memref<1x128xf32, #tpu.memory_space<vmem>>) target_semaphore(%34 : memref<!tpu.dma_semaphore, #tpu.memory_space<semaphore_mem>>)
    %c7 = arith.constant 7 : index
    %35 = memref.load %arg1[%c7] : memref<8xi32, #tpu.memory_space<smem>>
    %c7_i32 = arith.constant 7 : i32
    %c0_i32_21 = arith.constant 0 : i32
    %36 = tpu.memref_slice %arg2[%35, %c0_i32_21] : memref<1280x128xf32, #tpu.memory_space<any>> -> memref<1x128xf32, #tpu.memory_space<any>>
    %c7_i32_22 = arith.constant 7 : i32
    %c0_i32_23 = arith.constant 0 : i32
    %37 = tpu.memref_slice %arg14[%c7_i32_22, %c0_i32_23] : memref<8x128xf32, #tpu.memory_space<vmem>> -> memref<1x128xf32, #tpu.memory_space<vmem>>
    %38 = tpu.memref_slice %arg15[%c7_i32] : memref<8x!tpu.dma_semaphore, #tpu.memory_space<semaphore_mem>> -> memref<1x!tpu.dma_semaphore, #tpu.memory_space<semaphore_mem>>
    %39 = tpu.memref_squeeze %38 : memref<1x!tpu.dma_semaphore, #tpu.memory_space<semaphore_mem>> -> memref<!tpu.dma_semaphore, #tpu.memory_space<semaphore_mem>>
    tpu.enqueue_dma source(%36 : memref<1x128xf32, #tpu.memory_space<any>>) target(%37 : memref<1x128xf32, #tpu.memory_space<vmem>>) target_semaphore(%39 : memref<!tpu.dma_semaphore, #tpu.memory_space<semaphore_mem>>)
    %c0_i32_24 = arith.constant 0 : i32
    %c0_i32_25 = arith.constant 0 : i32
    %40 = tpu.memref_slice %arg2[%0, %c0_i32_25] : memref<1280x128xf32, #tpu.memory_space<any>> -> memref<1x128xf32, #tpu.memory_space<any>>
    %c0_i32_26 = arith.constant 0 : i32
    %c0_i32_27 = arith.constant 0 : i32
    %41 = tpu.memref_slice %arg14[%c0_i32_26, %c0_i32_27] : memref<8x128xf32, #tpu.memory_space<vmem>> -> memref<1x128xf32, #tpu.memory_space<vmem>>
    %42 = tpu.memref_slice %arg15[%c0_i32_24] : memref<8x!tpu.dma_semaphore, #tpu.memory_space<semaphore_mem>> -> memref<1x!tpu.dma_semaphore, #tpu.memory_space<semaphore_mem>>
    %43 = tpu.memref_squeeze %42 : memref<1x!tpu.dma_semaphore, #tpu.memory_space<semaphore_mem>> -> memref<!tpu.dma_semaphore, #tpu.memory_space<semaphore_mem>>
    tpu.wait_dma2 semaphore(%43 : memref<!tpu.dma_semaphore, #tpu.memory_space<semaphore_mem>>) src(%40 : memref<1x128xf32, #tpu.memory_space<any>>) dst(%41 : memref<1x128xf32, #tpu.memory_space<vmem>>)
    %c1_i32_28 = arith.constant 1 : i32
    %c0_i32_29 = arith.constant 0 : i32
    %44 = tpu.memref_slice %arg2[%5, %c0_i32_29] : memref<1280x128xf32, #tpu.memory_space<any>> -> memref<1x128xf32, #tpu.memory_space<any>>
    %c1_i32_30 = arith.constant 1 : i32
    %c0_i32_31 = arith.constant 0 : i32
    %45 = tpu.memref_slice %arg14[%c1_i32_30, %c0_i32_31] : memref<8x128xf32, #tpu.memory_space<vmem>> -> memref<1x128xf32, #tpu.memory_space<vmem>>
    %46 = tpu.memref_slice %arg15[%c1_i32_28] : memref<8x!tpu.dma_semaphore, #tpu.memory_space<semaphore_mem>> -> memref<1x!tpu.dma_semaphore, #tpu.memory_space<semaphore_mem>>
    %47 = tpu.memref_squeeze %46 : memref<1x!tpu.dma_semaphore, #tpu.memory_space<semaphore_mem>> -> memref<!tpu.dma_semaphore, #tpu.memory_space<semaphore_mem>>
    tpu.wait_dma2 semaphore(%47 : memref<!tpu.dma_semaphore, #tpu.memory_space<semaphore_mem>>) src(%44 : memref<1x128xf32, #tpu.memory_space<any>>) dst(%45 : memref<1x128xf32, #tpu.memory_space<vmem>>)
    %c2_i32_32 = arith.constant 2 : i32
    %c0_i32_33 = arith.constant 0 : i32
    %48 = tpu.memref_slice %arg2[%10, %c0_i32_33] : memref<1280x128xf32, #tpu.memory_space<any>> -> memref<1x128xf32, #tpu.memory_space<any>>
    %c2_i32_34 = arith.constant 2 : i32
    %c0_i32_35 = arith.constant 0 : i32
    %49 = tpu.memref_slice %arg14[%c2_i32_34, %c0_i32_35] : memref<8x128xf32, #tpu.memory_space<vmem>> -> memref<1x128xf32, #tpu.memory_space<vmem>>
    %50 = tpu.memref_slice %arg15[%c2_i32_32] : memref<8x!tpu.dma_semaphore, #tpu.memory_space<semaphore_mem>> -> memref<1x!tpu.dma_semaphore, #tpu.memory_space<semaphore_mem>>
    %51 = tpu.memref_squeeze %50 : memref<1x!tpu.dma_semaphore, #tpu.memory_space<semaphore_mem>> -> memref<!tpu.dma_semaphore, #tpu.memory_space<semaphore_mem>>
    tpu.wait_dma2 semaphore(%51 : memref<!tpu.dma_semaphore, #tpu.memory_space<semaphore_mem>>) src(%48 : memref<1x128xf32, #tpu.memory_space<any>>) dst(%49 : memref<1x128xf32, #tpu.memory_space<vmem>>)
    %c3_i32_36 = arith.constant 3 : i32
    %c0_i32_37 = arith.constant 0 : i32
    %52 = tpu.memref_slice %arg2[%15, %c0_i32_37] : memref<1280x128xf32, #tpu.memory_space<any>> -> memref<1x128xf32, #tpu.memory_space<any>>
    %c3_i32_38 = arith.constant 3 : i32
    %c0_i32_39 = arith.constant 0 : i32
    %53 = tpu.memref_slice %arg14[%c3_i32_38, %c0_i32_39] : memref<8x128xf32, #tpu.memory_space<vmem>> -> memref<1x128xf32, #tpu.memory_space<vmem>>
    %54 = tpu.memref_slice %arg15[%c3_i32_36] : memref<8x!tpu.dma_semaphore, #tpu.memory_space<semaphore_mem>> -> memref<1x!tpu.dma_semaphore, #tpu.memory_space<semaphore_mem>>
    %55 = tpu.memref_squeeze %54 : memref<1x!tpu.dma_semaphore, #tpu.memory_space<semaphore_mem>> -> memref<!tpu.dma_semaphore, #tpu.memory_space<semaphore_mem>>
    tpu.wait_dma2 semaphore(%55 : memref<!tpu.dma_semaphore, #tpu.memory_space<semaphore_mem>>) src(%52 : memref<1x128xf32, #tpu.memory_space<any>>) dst(%53 : memref<1x128xf32, #tpu.memory_space<vmem>>)
    %c4_i32_40 = arith.constant 4 : i32
    %c0_i32_41 = arith.constant 0 : i32
    %56 = tpu.memref_slice %arg2[%20, %c0_i32_41] : memref<1280x128xf32, #tpu.memory_space<any>> -> memref<1x128xf32, #tpu.memory_space<any>>
    %c4_i32_42 = arith.constant 4 : i32
    %c0_i32_43 = arith.constant 0 : i32
    %57 = tpu.memref_slice %arg14[%c4_i32_42, %c0_i32_43] : memref<8x128xf32, #tpu.memory_space<vmem>> -> memref<1x128xf32, #tpu.memory_space<vmem>>
    %58 = tpu.memref_slice %arg15[%c4_i32_40] : memref<8x!tpu.dma_semaphore, #tpu.memory_space<semaphore_mem>> -> memref<1x!tpu.dma_semaphore, #tpu.memory_space<semaphore_mem>>
    %59 = tpu.memref_squeeze %58 : memref<1x!tpu.dma_semaphore, #tpu.memory_space<semaphore_mem>> -> memref<!tpu.dma_semaphore, #tpu.memory_space<semaphore_mem>>
    tpu.wait_dma2 semaphore(%59 : memref<!tpu.dma_semaphore, #tpu.memory_space<semaphore_mem>>) src(%56 : memref<1x128xf32, #tpu.memory_space<any>>) dst(%57 : memref<1x128xf32, #tpu.memory_space<vmem>>)
    %c5_i32_44 = arith.constant 5 : i32
    %c0_i32_45 = arith.constant 0 : i32
    %60 = tpu.memref_slice %arg2[%25, %c0_i32_45] : memref<1280x128xf32, #tpu.memory_space<any>> -> memref<1x128xf32, #tpu.memory_space<any>>
    %c5_i32_46 = arith.constant 5 : i32
    %c0_i32_47 = arith.constant 0 : i32
    %61 = tpu.memref_slice %arg14[%c5_i32_46, %c0_i32_47] : memref<8x128xf32, #tpu.memory_space<vmem>> -> memref<1x128xf32, #tpu.memory_space<vmem>>
    %62 = tpu.memref_slice %arg15[%c5_i32_44] : memref<8x!tpu.dma_semaphore, #tpu.memory_space<semaphore_mem>> -> memref<1x!tpu.dma_semaphore, #tpu.memory_space<semaphore_mem>>
    %63 = tpu.memref_squeeze %62 : memref<1x!tpu.dma_semaphore, #tpu.memory_space<semaphore_mem>> -> memref<!tpu.dma_semaphore, #tpu.memory_space<semaphore_mem>>
    tpu.wait_dma2 semaphore(%63 : memref<!tpu.dma_semaphore, #tpu.memory_space<semaphore_mem>>) src(%60 : memref<1x128xf32, #tpu.memory_space<any>>) dst(%61 : memref<1x128xf32, #tpu.memory_space<vmem>>)
    %c6_i32_48 = arith.constant 6 : i32
    %c0_i32_49 = arith.constant 0 : i32
    %64 = tpu.memref_slice %arg2[%30, %c0_i32_49] : memref<1280x128xf32, #tpu.memory_space<any>> -> memref<1x128xf32, #tpu.memory_space<any>>
    %c6_i32_50 = arith.constant 6 : i32
    %c0_i32_51 = arith.constant 0 : i32
    %65 = tpu.memref_slice %arg14[%c6_i32_50, %c0_i32_51] : memref<8x128xf32, #tpu.memory_space<vmem>> -> memref<1x128xf32, #tpu.memory_space<vmem>>
    %66 = tpu.memref_slice %arg15[%c6_i32_48] : memref<8x!tpu.dma_semaphore, #tpu.memory_space<semaphore_mem>> -> memref<1x!tpu.dma_semaphore, #tpu.memory_space<semaphore_mem>>
    %67 = tpu.memref_squeeze %66 : memref<1x!tpu.dma_semaphore, #tpu.memory_space<semaphore_mem>> -> memref<!tpu.dma_semaphore, #tpu.memory_space<semaphore_mem>>
    tpu.wait_dma2 semaphore(%67 : memref<!tpu.dma_semaphore, #tpu.memory_space<semaphore_mem>>) src(%64 : memref<1x128xf32, #tpu.memory_space<any>>) dst(%65 : memref<1x128xf32, #tpu.memory_space<vmem>>)
    %c7_i32_52 = arith.constant 7 : i32
    %c0_i32_53 = arith.constant 0 : i32
    %68 = tpu.memref_slice %arg2[%35, %c0_i32_53] : memref<1280x128xf32, #tpu.memory_space<any>> -> memref<1x128xf32, #tpu.memory_space<any>>
    %c7_i32_54 = arith.constant 7 : i32
    %c0_i32_55 = arith.constant 0 : i32
    %69 = tpu.memref_slice %arg14[%c7_i32_54, %c0_i32_55] : memref<8x128xf32, #tpu.memory_space<vmem>> -> memref<1x128xf32, #tpu.memory_space<vmem>>
    %70 = tpu.memref_slice %arg15[%c7_i32_52] : memref<8x!tpu.dma_semaphore, #tpu.memory_space<semaphore_mem>> -> memref<1x!tpu.dma_semaphore, #tpu.memory_space<semaphore_mem>>
    %71 = tpu.memref_squeeze %70 : memref<1x!tpu.dma_semaphore, #tpu.memory_space<semaphore_mem>> -> memref<!tpu.dma_semaphore, #tpu.memory_space<semaphore_mem>>
    tpu.wait_dma2 semaphore(%71 : memref<!tpu.dma_semaphore, #tpu.memory_space<semaphore_mem>>) src(%68 : memref<1x128xf32, #tpu.memory_space<any>>) dst(%69 : memref<1x128xf32, #tpu.memory_space<vmem>>)
    %c0_56 = arith.constant 0 : index
    %c0_57 = arith.constant 0 : index
    %c0_58 = arith.constant 0 : index
    %72 = vector.load %arg3[%c0_56, %c0_57, %c0_58] : memref<2x8x128xf32, #tpu.memory_space<vmem>>, vector<2x8x128xf32>
    %c0_59 = arith.constant 0 : index
    %c0_60 = arith.constant 0 : index
    %73 = vector.load %arg14[%c0_59, %c0_60] : memref<8x128xf32, #tpu.memory_space<vmem>>, vector<8x128xf32>
    %74 = vector.extract_strided_slice %72 {offsets = [0, 0, 0], sizes = [1, 8, 128], strides = [1, 1, 1]} : vector<2x8x128xf32> to vector<1x8x128xf32>
    %75 = vector.shape_cast %74 : vector<1x8x128xf32> to vector<8x128xf32>
    %76 = arith.truncf %73 : vector<8x128xf32> to vector<8x128xbf16>
    %c0_61 = arith.constant 0 : index
    %c0_62 = arith.constant 0 : index
    %c0_63 = arith.constant 0 : index
    %77 = vector.load %arg4[%c0_61, %c0_62, %c0_63] : memref<2x128x384xbf16, #tpu.memory_space<vmem>>, vector<1x128x384xbf16>
    %78 = vector.shape_cast %77 : vector<1x128x384xbf16> to vector<128x384xbf16>
    %cst = arith.constant dense<0.000000e+00> : vector<8x384xf32>
    %79 = tpu.matmul %76, %78, %cst {dimension_numbers = #tpu.dot_dimension_numbers<[1], [0], [0], [1], [0, 0, 1, 1], [], []>} : vector<8x128xbf16>, vector<128x384xbf16>, vector<8x384xf32> -> vector<8x384xf32>
    %c0_64 = arith.constant 0 : index
    %c0_65 = arith.constant 0 : index
    %c0_66 = arith.constant 0 : index
    %80 = vector.load %arg6[%c0_64, %c0_65, %c0_66] : memref<2x1x384xf32, #tpu.memory_space<vmem>>, vector<1x1x384xf32>
    %81 = vector.shape_cast %80 : vector<1x1x384xf32> to vector<1x384xf32>
    %82 = vector.broadcast %81 : vector<1x384xf32> to vector<8x384xf32>
    %83 = arith.addf %79, %82 : vector<8x384xf32>
    %84 = arith.truncf %75 : vector<8x128xf32> to vector<8x128xbf16>
    %c0_67 = arith.constant 0 : index
    %c0_68 = arith.constant 0 : index
    %c0_69 = arith.constant 0 : index
    %85 = vector.load %arg5[%c0_67, %c0_68, %c0_69] : memref<2x128x384xbf16, #tpu.memory_space<vmem>>, vector<1x128x384xbf16>
    %86 = vector.shape_cast %85 : vector<1x128x384xbf16> to vector<128x384xbf16>
    %cst_70 = arith.constant dense<0.000000e+00> : vector<8x384xf32>
    %87 = tpu.matmul %84, %86, %cst_70 {dimension_numbers = #tpu.dot_dimension_numbers<[1], [0], [0], [1], [0, 0, 1, 1], [], []>} : vector<8x128xbf16>, vector<128x384xbf16>, vector<8x384xf32> -> vector<8x384xf32>
    %c0_71 = arith.constant 0 : index
    %c0_72 = arith.constant 0 : index
    %c0_73 = arith.constant 0 : index
    %88 = vector.load %arg7[%c0_71, %c0_72, %c0_73] : memref<2x1x384xf32, #tpu.memory_space<vmem>>, vector<1x1x384xf32>
    %89 = vector.shape_cast %88 : vector<1x1x384xf32> to vector<1x384xf32>
    %90 = vector.broadcast %89 : vector<1x384xf32> to vector<8x384xf32>
    %91 = arith.addf %87, %90 : vector<8x384xf32>
    %92 = vector.extract_strided_slice %83 {offsets = [0, 0], sizes = [8, 128], strides = [1, 1]} : vector<8x384xf32> to vector<8x128xf32>
    %93 = vector.extract_strided_slice %91 {offsets = [0, 0], sizes = [8, 128], strides = [1, 1]} : vector<8x384xf32> to vector<8x128xf32>
    %94 = arith.addf %92, %93 : vector<8x128xf32>
    %95 = arith.negf %94 : vector<8x128xf32>
    %96 = math.exp %95 : vector<8x128xf32>
    %cst_74 = arith.constant 1.000000e+00 : f32
    %97 = vector.broadcast %cst_74 : f32 to vector<8x128xf32>
    %98 = arith.addf %97, %96 : vector<8x128xf32>
    %99 = arith.divf %97, %98 : vector<8x128xf32>
    %100 = vector.extract_strided_slice %83 {offsets = [0, 128], sizes = [8, 128], strides = [1, 1]} : vector<8x384xf32> to vector<8x128xf32>
    %101 = vector.extract_strided_slice %91 {offsets = [0, 128], sizes = [8, 128], strides = [1, 1]} : vector<8x384xf32> to vector<8x128xf32>
    %102 = arith.addf %100, %101 : vector<8x128xf32>
    %103 = arith.negf %102 : vector<8x128xf32>
    %104 = math.exp %103 : vector<8x128xf32>
    %cst_75 = arith.constant 1.000000e+00 : f32
    %105 = vector.broadcast %cst_75 : f32 to vector<8x128xf32>
    %106 = arith.addf %105, %104 : vector<8x128xf32>
    %107 = arith.divf %105, %106 : vector<8x128xf32>
    %108 = vector.extract_strided_slice %83 {offsets = [0, 256], sizes = [8, 128], strides = [1, 1]} : vector<8x384xf32> to vector<8x128xf32>
    %109 = vector.extract_strided_slice %91 {offsets = [0, 256], sizes = [8, 128], strides = [1, 1]} : vector<8x384xf32> to vector<8x128xf32>
    %110 = arith.mulf %99, %109 : vector<8x128xf32>
    %111 = arith.addf %108, %110 : vector<8x128xf32>
    %112 = math.tanh %111 : vector<8x128xf32>
    %cst_76 = arith.constant 1.000000e+00 : f32
    %113 = vector.broadcast %cst_76 : f32 to vector<8x128xf32>
    %114 = arith.subf %113, %107 : vector<8x128xf32>
    %115 = arith.mulf %114, %112 : vector<8x128xf32>
    %116 = arith.mulf %107, %75 : vector<8x128xf32>
    %117 = arith.addf %115, %116 : vector<8x128xf32>
    %c0_77 = arith.constant 0 : index
    %c0_78 = arith.constant 0 : index
    %c0_79 = arith.constant 0 : index
    %118 = vector.load %arg12[%c0_77, %c0_78, %c0_79] : memref<2x8x128xf32, #tpu.memory_space<vmem>>, vector<1x8x128xf32>
    %119 = vector.shape_cast %118 : vector<1x8x128xf32> to vector<8x128xf32>
    %120 = vector.shape_cast %117 : vector<8x128xf32> to vector<1x8x128xf32>
    tpu.vector_store %arg12[%c0_77, %c0_78, %c0_79], %120 {strides = array<i32>} : memref<2x8x128xf32, #tpu.memory_space<vmem>>, vector<1x8x128xf32>,
    %121 = vector.extract_strided_slice %72 {offsets = [1, 0, 0], sizes = [1, 8, 128], strides = [1, 1, 1]} : vector<2x8x128xf32> to vector<1x8x128xf32>
    %122 = vector.shape_cast %121 : vector<1x8x128xf32> to vector<8x128xf32>
    %123 = arith.truncf %117 : vector<8x128xf32> to vector<8x128xbf16>
    %c1_80 = arith.constant 1 : index
    %c0_81 = arith.constant 0 : index
    %c0_82 = arith.constant 0 : index
    %124 = vector.load %arg4[%c1_80, %c0_81, %c0_82] : memref<2x128x384xbf16, #tpu.memory_space<vmem>>, vector<1x128x384xbf16>
    %125 = vector.shape_cast %124 : vector<1x128x384xbf16> to vector<128x384xbf16>
    %cst_83 = arith.constant dense<0.000000e+00> : vector<8x384xf32>
    %126 = tpu.matmul %123, %125, %cst_83 {dimension_numbers = #tpu.dot_dimension_numbers<[1], [0], [0], [1], [0, 0, 1, 1], [], []>} : vector<8x128xbf16>, vector<128x384xbf16>, vector<8x384xf32> -> vector<8x384xf32>
    %c1_84 = arith.constant 1 : index
    %c0_85 = arith.constant 0 : index
    %c0_86 = arith.constant 0 : index
    %127 = vector.load %arg6[%c1_84, %c0_85, %c0_86] : memref<2x1x384xf32, #tpu.memory_space<vmem>>, vector<1x1x384xf32>
    %128 = vector.shape_cast %127 : vector<1x1x384xf32> to vector<1x384xf32>
    %129 = vector.broadcast %128 : vector<1x384xf32> to vector<8x384xf32>
    %130 = arith.addf %126, %129 : vector<8x384xf32>
    %131 = arith.truncf %122 : vector<8x128xf32> to vector<8x128xbf16>
    %c1_87 = arith.constant 1 : index
    %c0_88 = arith.constant 0 : index
    %c0_89 = arith.constant 0 : index
    %132 = vector.load %arg5[%c1_87, %c0_88, %c0_89] : memref<2x128x384xbf16, #tpu.memory_space<vmem>>, vector<1x128x384xbf16>
    %133 = vector.shape_cast %132 : vector<1x128x384xbf16> to vector<128x384xbf16>
    %cst_90 = arith.constant dense<0.000000e+00> : vector<8x384xf32>
    %134 = tpu.matmul %131, %133, %cst_90 {dimension_numbers = #tpu.dot_dimension_numbers<[1], [0], [0], [1], [0, 0, 1, 1], [], []>} : vector<8x128xbf16>, vector<128x384xbf16>, vector<8x384xf32> -> vector<8x384xf32>
    %c1_91 = arith.constant 1 : index
    %c0_92 = arith.constant 0 : index
    %c0_93 = arith.constant 0 : index
    %135 = vector.load %arg7[%c1_91, %c0_92, %c0_93] : memref<2x1x384xf32, #tpu.memory_space<vmem>>, vector<1x1x384xf32>
    %136 = vector.shape_cast %135 : vector<1x1x384xf32> to vector<1x384xf32>
    %137 = vector.broadcast %136 : vector<1x384xf32> to vector<8x384xf32>
    %138 = arith.addf %134, %137 : vector<8x384xf32>
    %139 = vector.extract_strided_slice %130 {offsets = [0, 0], sizes = [8, 128], strides = [1, 1]} : vector<8x384xf32> to vector<8x128xf32>
    %140 = vector.extract_strided_slice %138 {offsets = [0, 0], sizes = [8, 128], strides = [1, 1]} : vector<8x384xf32> to vector<8x128xf32>
    %141 = arith.addf %139, %140 : vector<8x128xf32>
    %142 = arith.negf %141 : vector<8x128xf32>
    %143 = math.exp %142 : vector<8x128xf32>
    %cst_94 = arith.constant 1.000000e+00 : f32
    %144 = vector.broadcast %cst_94 : f32 to vector<8x128xf32>
    %145 = arith.addf %144, %143 : vector<8x128xf32>
    %146 = arith.divf %144, %145 : vector<8x128xf32>
    %147 = vector.extract_strided_slice %130 {offsets = [0, 128], sizes = [8, 128], strides = [1, 1]} : vector<8x384xf32> to vector<8x128xf32>
    %148 = vector.extract_strided_slice %138 {offsets = [0, 128], sizes = [8, 128], strides = [1, 1]} : vector<8x384xf32> to vector<8x128xf32>
    %149 = arith.addf %147, %148 : vector<8x128xf32>
    %150 = arith.negf %149 : vector<8x128xf32>
    %151 = math.exp %150 : vector<8x128xf32>
    %cst_95 = arith.constant 1.000000e+00 : f32
    %152 = vector.broadcast %cst_95 : f32 to vector<8x128xf32>
    %153 = arith.addf %152, %151 : vector<8x128xf32>
    %154 = arith.divf %152, %153 : vector<8x128xf32>
    %155 = vector.extract_strided_slice %130 {offsets = [0, 256], sizes = [8, 128], strides = [1, 1]} : vector<8x384xf32> to vector<8x128xf32>
    %156 = vector.extract_strided_slice %138 {offsets = [0, 256], sizes = [8, 128], strides = [1, 1]} : vector<8x384xf32> to vector<8x128xf32>
    %157 = arith.mulf %146, %156 : vector<8x128xf32>
    %158 = arith.addf %155, %157 : vector<8x128xf32>
    %159 = math.tanh %158 : vector<8x128xf32>
    %cst_96 = arith.constant 1.000000e+00 : f32
    %160 = vector.broadcast %cst_96 : f32 to vector<8x128xf32>
    %161 = arith.subf %160, %154 : vector<8x128xf32>
    %162 = arith.mulf %161, %159 : vector<8x128xf32>
    %163 = arith.mulf %154, %122 : vector<8x128xf32>
    %164 = arith.addf %162, %163 : vector<8x128xf32>
    %c1_97 = arith.constant 1 : index
    %c0_98 = arith.constant 0 : index
    %c0_99 = arith.constant 0 : index
    %165 = vector.load %arg12[%c1_97, %c0_98, %c0_99] : memref<2x8x128xf32, #tpu.memory_space<vmem>>, vector<1x8x128xf32>
    %166 = vector.shape_cast %165 : vector<1x8x128xf32> to vector<8x128xf32>
    %167 = vector.shape_cast %164 : vector<8x128xf32> to vector<1x8x128xf32>
    tpu.vector_store %arg12[%c1_97, %c0_98, %c0_99], %167 {strides = array<i32>} : memref<2x8x128xf32, #tpu.memory_space<vmem>>, vector<1x8x128xf32>,
    %168 = arith.truncf %164 : vector<8x128xf32> to vector<8x128xbf16>
    %c0_100 = arith.constant 0 : index
    %c0_101 = arith.constant 0 : index
    %169 = vector.load %arg8[%c0_100, %c0_101] : memref<128x128xbf16, #tpu.memory_space<vmem>>, vector<128x128xbf16>
    %cst_102 = arith.constant dense<0.000000e+00> : vector<8x128xf32>
    %170 = tpu.matmul %168, %169, %cst_102 {dimension_numbers = #tpu.dot_dimension_numbers<[1], [0], [0], [1], [0, 0, 1, 1], [], []>} : vector<8x128xbf16>, vector<128x128xbf16>, vector<8x128xf32> -> vector<8x128xf32>
    %c0_103 = arith.constant 0 : index
    %c0_104 = arith.constant 0 : index
    %171 = vector.load %arg9[%c0_103, %c0_104] : memref<1x128xf32, #tpu.memory_space<vmem>>, vector<1x128xf32>
    %172 = vector.broadcast %171 : vector<1x128xf32> to vector<8x128xf32>
    %173 = arith.addf %170, %172 : vector<8x128xf32>
    %174 = arith.truncf %173 : vector<8x128xf32> to vector<8x128xbf16>
    %c0_105 = arith.constant 0 : index
    %c0_106 = arith.constant 0 : index
    %175 = vector.load %arg10[%c0_105, %c0_106] : memref<128x128xbf16, #tpu.memory_space<vmem>>, vector<128x128xbf16>
    %cst_107 = arith.constant dense<0.000000e+00> : vector<8x128xf32>
    %176 = tpu.matmul %174, %175, %cst_107 {dimension_numbers = #tpu.dot_dimension_numbers<[1], [0], [0], [1], [0, 0, 1, 1], [], []>} : vector<8x128xbf16>, vector<128x128xbf16>, vector<8x128xf32> -> vector<8x128xf32>
    %c0_108 = arith.constant 0 : index
    %c0_109 = arith.constant 0 : index
    %177 = vector.load %arg11[%c0_108, %c0_109] : memref<1x128xf32, #tpu.memory_space<vmem>>, vector<1x128xf32>
    %178 = vector.broadcast %177 : vector<1x128xf32> to vector<8x128xf32>
    %179 = arith.addf %176, %178 : vector<8x128xf32>
    %180 = arith.truncf %179 : vector<8x128xf32> to vector<8x128xbf16>
    %c0_110 = arith.constant 0 : index
    %c0_111 = arith.constant 0 : index
    %181 = vector.load %arg13[%c0_110, %c0_111] : memref<8x128xbf16, #tpu.memory_space<vmem>>, vector<8x128xbf16>
    tpu.vector_store %arg13[%c0_110, %c0_111], %180 {strides = array<i32>} : memref<8x128xbf16, #tpu.memory_space<vmem>>, vector<8x128xbf16>,
    return
  }
  func.func @transform_1(%arg0: i32, %arg1: memref<8xi32, #tpu.memory_space<smem>>) -> (i32, i32, i32) {
    %c0_i32 = arith.constant 0 : i32
    %c0_i32_0 = arith.constant 0 : i32
    %c0_i32_1 = arith.constant 0 : i32
    %c0_i32_2 = arith.constant 0 : i32
    return %c0_i32, %c0_i32_0, %c0_i32_1 : i32, i32, i32
  }
  func.func @transform_2(%arg0: i32, %arg1: memref<8xi32, #tpu.memory_space<smem>>) -> (i32, i32, i32) {
    %c0_i32 = arith.constant 0 : i32
    %c0_i32_0 = arith.constant 0 : i32
    %c0_i32_1 = arith.constant 0 : i32
    %c0_i32_2 = arith.constant 0 : i32
    return %c0_i32, %c0_i32_0, %c0_i32_1 : i32, i32, i32
  }
  func.func @transform_3(%arg0: i32, %arg1: memref<8xi32, #tpu.memory_space<smem>>) -> (i32, i32, i32) {
    %c0_i32 = arith.constant 0 : i32
    %c0_i32_0 = arith.constant 0 : i32
    %c0_i32_1 = arith.constant 0 : i32
    %c0_i32_2 = arith.constant 0 : i32
    return %c0_i32, %c0_i32_0, %c0_i32_1 : i32, i32, i32
  }
  func.func @transform_4(%arg0: i32, %arg1: memref<8xi32, #tpu.memory_space<smem>>) -> (i32, i32, i32) {
    %c0_i32 = arith.constant 0 : i32
    %c0_i32_0 = arith.constant 0 : i32
    %c0_i32_1 = arith.constant 0 : i32
    %c0_i32_2 = arith.constant 0 : i32
    return %c0_i32, %c0_i32_0, %c0_i32_1 : i32, i32, i32
  }
  func.func @transform_5(%arg0: i32, %arg1: memref<8xi32, #tpu.memory_space<smem>>) -> (i32, i32, i32) {
    %c0_i32 = arith.constant 0 : i32
    %c0_i32_0 = arith.constant 0 : i32
    %c0_i32_1 = arith.constant 0 : i32
    %c0_i32_2 = arith.constant 0 : i32
    return %c0_i32, %c0_i32_0, %c0_i32_1 : i32, i32, i32
  }
  func.func @transform_6(%arg0: i32, %arg1: memref<8xi32, #tpu.memory_space<smem>>) -> (i32, i32) {
    %c0_i32 = arith.constant 0 : i32
    %c0_i32_0 = arith.constant 0 : i32
    %c0_i32_1 = arith.constant 0 : i32
    return %c0_i32, %c0_i32_0 : i32, i32
  }
  func.func @transform_7(%arg0: i32, %arg1: memref<8xi32, #tpu.memory_space<smem>>) -> (i32, i32) {
    %c0_i32 = arith.constant 0 : i32
    %c0_i32_0 = arith.constant 0 : i32
    %c0_i32_1 = arith.constant 0 : i32
    return %c0_i32, %c0_i32_0 : i32, i32
  }
  func.func @transform_8(%arg0: i32, %arg1: memref<8xi32, #tpu.memory_space<smem>>) -> (i32, i32) {
    %c0_i32 = arith.constant 0 : i32
    %c0_i32_0 = arith.constant 0 : i32
    %c0_i32_1 = arith.constant 0 : i32
    return %c0_i32, %c0_i32_0 : i32, i32
  }
  func.func @transform_9(%arg0: i32, %arg1: memref<8xi32, #tpu.memory_space<smem>>) -> (i32, i32) {
    %c0_i32 = arith.constant 0 : i32
    %c0_i32_0 = arith.constant 0 : i32
    %c0_i32_1 = arith.constant 0 : i32
    return %c0_i32, %c0_i32_0 : i32, i32
  }
  func.func @transform_10(%arg0: i32, %arg1: memref<8xi32, #tpu.memory_space<smem>>) -> (i32, i32, i32) {
    %c0_i32 = arith.constant 0 : i32
    %c0_i32_0 = arith.constant 0 : i32
    %c0_i32_1 = arith.constant 0 : i32
    %c0_i32_2 = arith.constant 0 : i32
    return %c0_i32, %c0_i32_0, %c0_i32_1 : i32, i32, i32
  }
  func.func @transform_11(%arg0: i32, %arg1: memref<8xi32, #tpu.memory_space<smem>>) -> (i32, i32) {
    %c0_i32 = arith.constant 0 : i32
    %c0_i32_0 = arith.constant 0 : i32
    %c0_i32_1 = arith.constant 0 : i32
    return %c0_i32, %c0_i32_0 : i32, i32
  }
}

</mosaic_0001>

<llo_original>
// kernel: decoder_forward.3
$region0: #{decoder_forward.3}
  #allocation0 [shape = 'u32[]', space=smem, size = 0x4, offset = 0x4, fixed_abs, tag = 'smem constant byte address 0x4 - core index']
  #allocation1 [shape = 'u32[72,128]{1,0:T(1,128)}', space=vmem, size = 0x9000, scoped, tag = 'internal scratch']
  %s0 = inlined_call_operand.vmem [shape: bf16[8,128], index: 0, kind: input, shape index: {}]
  %s1 = inlined_call_operand.hbm [shape: bf16[128,1536], index: 1, kind: input, shape index: {}]
  %s2 = inlined_call_operand.hbm [shape: f32[1,1536], index: 2, kind: input, shape index: {}]
  %s3 = inlined_call_operand.hbm [shape: f32[8,1536], index: 3, kind: output, shape index: {}]
  %s4 = sld [smem:[#allocation0]]
  $region53: #{decoder_forward.3} parent=0
    _
  %s6 = ssub.s32 1, %s4
  %s7 = scalar_select 0, %s6, %s4
  $region1: #{decoder_forward.3} parent=0
    #allocation2 [shape = 'u8[262144]{0}', space=vmem, size = 0x40000, scoped, tag = 'input window, operand 1']
    #allocation3 [shape = 's32[2]{0}', space=sflag, size = 0x8, scoped, tag = 'scoped memory for decoder_forward.3']
    #allocation4 [shape = 's32[2]{0}', space=sflag, size = 0x8, scoped, tag = 'scoped memory for decoder_forward.3']
    #allocation5 [shape = 'u8[4096]{0}', space=vmem, size = 0x1000, scoped, tag = 'input window, operand 2']
    #allocation6 [shape = 's32[2]{0}', space=sflag, size = 0x8, scoped, tag = 'scoped memory for decoder_forward.3']
    #allocation7 [shape = 'u8[32768]{0}', space=vmem, size = 0x8000, scoped, tag = 'output window, operand 0']
    %8 = vsyncpa [#allocation3], 0
    %s9 = scalar_lea.sflag [#allocation3], 1
    %10 = vsyncpa %s9, 0
    %11 = vsyncpa [#allocation6], 0
    %s12 = scalar_lea.sflag [#allocation6], 1
    %13 = vsyncpa %s12, 0
    %14 = vsyncpa [#allocation4], 0
    %s15 = scalar_lea.sflag [#allocation4], 1
    %16 = vsyncpa %s15, 0
    loop: start=0, step=1, limit=5
    $region2: #{decoder_forward.3} parent=1 // loop_pre_header
      _
    $region3: #{decoder_forward.3} parent=1 // loop_header
      %s18 = sphi 0, %s22
      %p19 = scmp.ge.s32.totalorder %s18, 5
      %s26 = sphi 0, %s26
      %s28 = sphi 0, %s26
      %s29 = sphi 0, %s28
      %s43 = sphi 0, %s29
      %s49 = sphi 0, %s51
      %s52 = sphi 0, %s49
      %s53 = sphi 0, %s52
      %s69 = sphi 0, %s53
      %s75 = sphi 0, %s77
      %s78 = sphi 0, %s75
      %s79 = sphi 0, %s78
      %s95 = sphi 0, %s79
      %s101 = sphi 0, %s103
      %s104 = sphi 0, %s101
      %s105 = sphi 0, %s104
      %s121 = sphi 0, %s105
    $region4: #{decoder_forward.3} parent=1 // loop_header_branch
      %21 = sbr.rel (%p19) target = $region8
    $region5: #{decoder_forward.3} parent=1 // loop_body
      %s23 = ssub.s32 %s18, 1
      %s24 = ssub.s32 %s18, 2
      %s25 = sadd.s32 %s18, 1
      %s27 = sadd.s32 %s26, 1
      %p30 = scmp.eq.s32.totalorder %s18, 2
      %p31 = scmp.ne.s32.totalorder %s26, %s28
      %p32 = scmp.eq.s32.totalorder %s18, 0
      %p33 = por %p31, %p32
      %p34 = scmp.ne.s32.totalorder %s26, %s28
      %p35 = scmp.eq.s32.totalorder %s23, 2
      %p36 = por %p34, %p35
      %p37 = scmp.ne.s32.totalorder %s28, %s29
      %p38 = scmp.eq.s32.totalorder %s23, 0
      %p39 = por %p37, %p38
      %p40 = scmp.ne.s32.totalorder %s28, %s29
      %p41 = scmp.eq.s32.totalorder %s24, 2
      %p42 = por %p40, %p41
      %p44 = scmp.ne.s32.totalorder %s29, %s43
      %p45 = scmp.eq.s32.totalorder %s24, 0
      %p46 = por %p44, %p45
      %s47 = ssub.s32 %s18, %s25
      %p48 = scmp.eq.s32.totalorder %s47, 0
      %s50 = sadd.s32 %s49, 1
      %s51 = scalar_select %p48, %s49, %s50
      %p54 = pneg %p48
      %p55 = scmp.eq.s32.totalorder %s18, 2
      %p56 = por %p54, %p55
      %p57 = scmp.ne.s32.totalorder %s49, %s52
      %p58 = scmp.eq.s32.totalorder %s18, 0
      %p59 = por %p57, %p58
      %p60 = scmp.ne.s32.totalorder %s49, %s52
      %p61 = scmp.eq.s32.totalorder %s23, 2
      %p62 = por %p60, %p61
      %p63 = scmp.ne.s32.totalorder %s52, %s53
      %p64 = scmp.eq.s32.totalorder %s23, 0
      %p65 = por %p63, %p64
      %p66 = scmp.ne.s32.totalorder %s52, %s53
      %p67 = scmp.eq.s32.totalorder %s24, 2
      %p68 = por %p66, %p67
      %p70 = scmp.ne.s32.totalorder %s53, %s69
      %p71 = scmp.eq.s32.totalorder %s24, 0
      %p72 = por %p70, %p71
      %s73 = ssub.s32 %s18, %s25
      %p74 = scmp.eq.s32.totalorder %s73, 0
      %s76 = sadd.s32 %s75, 1
      %s77 = scalar_select %p74, %s75, %s76
      %p80 = pneg %p74
      %p81 = scmp.eq.s32.totalorder %s18, 2
      %p82 = por %p80, %p81
      %p83 = scmp.ne.s32.totalorder %s75, %s78
      %p84 = scmp.eq.s32.totalorder %s18, 0
      %p85 = por %p83, %p84
      %p86 = scmp.ne.s32.totalorder %s75, %s78
      %p87 = scmp.eq.s32.totalorder %s23, 2
      %p88 = por %p86, %p87
      %p89 = scmp.ne.s32.totalorder %s78, %s79
      %p90 = scmp.eq.s32.totalorder %s23, 0
      %p91 = por %p89, %p90
      %p92 = scmp.ne.s32.totalorder %s78, %s79
      %p93 = scmp.eq.s32.totalorder %s24, 2
      %p94 = por %p92, %p93
      %p96 = scmp.ne.s32.totalorder %s79, %s95
      %p97 = scmp.eq.s32.totalorder %s24, 0
      %p98 = por %p96, %p97
      %s99 = ssub.s32 %s18, %s25
      %p100 = scmp.eq.s32.totalorder %s99, 0
      %s102 = sadd.s32 %s101, 1
      %s103 = scalar_select %p100, %s101, %s102
      %p106 = pneg %p100
      %p107 = scmp.eq.s32.totalorder %s18, 2
      %p108 = por %p106, %p107
      %p109 = scmp.ne.s32.totalorder %s101, %s104
      %p110 = scmp.eq.s32.totalorder %s18, 0
      %p111 = por %p109, %p110
      %p112 = scmp.ne.s32.totalorder %s101, %s104
      %p113 = scmp.eq.s32.totalorder %s23, 2
      %p114 = por %p112, %p113
      %p115 = scmp.ne.s32.totalorder %s104, %s105
      %p116 = scmp.eq.s32.totalorder %s23, 0
      %p117 = por %p115, %p116
      %p118 = scmp.ne.s32.totalorder %s104, %s105
      %p119 = scmp.eq.s32.totalorder %s24, 2
      %p120 = por %p118, %p119
      %p122 = scmp.ne.s32.totalorder %s105, %s121
      %p123 = scmp.eq.s32.totalorder %s24, 0
      %p124 = por %p122, %p123
      %p125 = scmp.le.s32.totalorder 1, %s18
      %p126 = scmp.lt.s32.totalorder %s18, 4
      %p127 = pnand %p125, %p126
      %p128 = pneg %p127
      // Predicated region
      $region9: #{decoder_forward.3} parent=5 // pred_check
        _
      $region10: #{decoder_forward.3} parent=5 // pred_check_branch
        %130 = sbr.rel (%p127) target = $region12
      $region11: #{decoder_forward.3} parent=5 // pred_region
        %s131 = ssub.s32 %s18, 1
        // Predicated region
        $region13: #{decoder_forward.3} parent=11 // pred_check
          %p132 = pneg %p39
        $region14: #{decoder_forward.3} parent=11 // pred_check_branch
          %134 = sbr.rel (%p132) target = $region16
        $region15: #{decoder_forward.3} parent=11 // pred_region
          _
        $region16: #{decoder_forward.3} parent=11 // pred_fallthru
          _
      $region12: #{decoder_forward.3} parent=5 // pred_fallthru
        _
      %p135 = scmp.lt.s32.totalorder %s18, 3
      // Predicated region
      $region17: #{decoder_forward.3} parent=5 // pred_check
        %p136 = pneg %p135
      $region18: #{decoder_forward.3} parent=5 // pred_check_branch
        %138 = sbr.rel (%p136) target = $region20
      $region19: #{decoder_forward.3} parent=5 // pred_region
        // Predicated region
        $region21: #{decoder_forward.3} parent=19 // pred_check
          %p139 = pneg %p59
        $region22: #{decoder_forward.3} parent=19 // pred_check_branch
          %141 = sbr.rel (%p139) target = $region24
        $region23: #{decoder_forward.3} parent=19 // pred_region
          %s142 = sand.u32 %s49, 1
          %s143 = scalar_lea.sflag [#allocation3], %s142
          %s144 = sand.u32 %s49, 1
          %s145 = smul.addr %s144, 256
          %s146 = scalar_lea.vmem [#allocation2], %s145
          %s147 = smul.u32 4, %s18
          %149 = vsyncadd %s143, 0
          %s150 = smul.addr %s147, 4
          %s151 = scalar_lea.hbm %s1, %s150
          %s152 = sshll.u32 %s151, 4
          %s153 = int_to_ptr.hbm [resolvable:$true] %s152
          %s154 = sshll.u32 %s146, 4
          %s155 = int_to_ptr.vmem [resolvable:$true] %s154
          %160 = dma.hbm_to_vmem [thread:$0]  %s153, 4096, %s155, %s143, 768, 256, 16
        $region24: #{decoder_forward.3} parent=19 // pred_fallthru
          _
        // Predicated region
        $region25: #{decoder_forward.3} parent=19 // pred_check
          %p161 = pneg %p85
        $region26: #{decoder_forward.3} parent=19 // pred_check_branch
          %163 = sbr.rel (%p161) target = $region28
        $region27: #{decoder_forward.3} parent=19 // pred_region
          %s164 = sand.u32 %s75, 1
          %s165 = scalar_lea.sflag [#allocation6], %s164
          %s166 = sand.u32 %s75, 1
          %s167 = smul.addr %s166, 4
          %s168 = scalar_lea.vmem [#allocation5], %s167
          %s169 = smul.u32 4, %s18
          %171 = vsyncadd %s165, 0
          %s172 = scalar_lea.hbm %s2, %s169
          %s174 = sshll.u32 %s172, 4
          %s175 = int_to_ptr.hbm [resolvable:$true] %s174
          %s176 = sshll.u32 %s168, 4
          %s177 = int_to_ptr.vmem [resolvable:$true] %s176
          %179 = dma.hbm_to_vmem [thread:$0]  %s175, 64, %s177, %s165
        $region28: #{decoder_forward.3} parent=19 // pred_fallthru
          _
      $region20: #{decoder_forward.3} parent=5 // pred_fallthru
        _
      %p180 = scmp.le.s32.totalorder 1, %s18
      %p181 = scmp.lt.s32.totalorder %s18, 4
      %p182 = pnand %p180, %p181
      %p183 = pneg %p182
      // Predicated region
      $region29: #{decoder_forward.3} parent=5 // pred_check
        _
      $region30: #{decoder_forward.3} parent=5 // pred_check_branch
        %185 = sbr.rel (%p182) target = $region32
      $region31: #{decoder_forward.3} parent=5 // pred_region
        %s186 = ssub.s32 %s18, 1
        %s187 = sand.u32 %s52, 1
        %s188 = scalar_lea.sflag [#allocation3], %s187
        %s189 = sand.u32 %s52, 1
        %s190 = smul.addr %s189, 256
        %s191 = scalar_lea.vmem [#allocation2], %s190
        // Predicated region
        $region33: #{decoder_forward.3} parent=31 // pred_check
          %p192 = pneg %p65
        $region34: #{decoder_forward.3} parent=31 // pred_check_branch
          %194 = sbr.rel (%p192) target = $region36
        $region35: #{decoder_forward.3} parent=31 // pred_region
          %196 = dma.done %s188, 4096
        $region36: #{decoder_forward.3} parent=31 // pred_fallthru
          _
        %s197 = sand.u32 %s78, 1
        %s198 = scalar_lea.sflag [#allocation6], %s197
        %s199 = sand.u32 %s78, 1
        %s200 = smul.addr %s199, 4
        %s201 = scalar_lea.vmem [#allocation5], %s200
        // Predicated region
        $region37: #{decoder_forward.3} parent=31 // pred_check
          %p202 = pneg %p91
        $region38: #{decoder_forward.3} parent=31 // pred_check_branch
          %204 = sbr.rel (%p202) target = $region40
        $region39: #{decoder_forward.3} parent=31 // pred_region
          %206 = dma.done %s198, 64
        $region40: #{decoder_forward.3} parent=31 // pred_fallthru
          _
        %p207 = pneg %p39
        %p208 = pneg %p36
        %s209 = sand.u32 %s52, 1
        %s210 = scalar_lea.sflag [#allocation3], %s209
        %s211 = sand.u32 %s52, 1
        %s212 = smul.addr %s211, 256
        %s213 = scalar_lea.vmem [#allocation2], %s212
        %p214 = pneg %p65
        %p215 = pneg %p62
        %s216 = sand.u32 %s78, 1
        %s217 = scalar_lea.sflag [#allocation6], %s216
        %s218 = sand.u32 %s78, 1
        %s219 = smul.addr %s218, 4
        %s220 = scalar_lea.vmem [#allocation5], %s219
        %p221 = pneg %p91
        %p222 = pneg %p88
        %p223 = pneg %p117
        %p224 = pneg %p114
        %s225 = sand.u32 %s104, 1
        %s226 = scalar_lea.sflag [#allocation4], %s225
        %s227 = sand.u32 %s104, 1
        %s228 = smul.addr %s227, 32
        %s229 = scalar_lea.vmem [#allocation7], %s228
        %s230 = smul.u32 4, %s23
        %s231 = smul.u32 4, %s23
        %s232 = smul.u32 4, %s23
        %v233 = vld [vmem:[%s0] sm:$0xf]
        %v234 = vld [vmem:[%s191] sm:$0xff]
        %v235 = vld [vmem:[%s191 + $0x8] sm:$0xff]
        %v236 = vld [vmem:[%s191 + $0x10] sm:$0xff]
        %v237 = vld [vmem:[%s191 + $0x18] sm:$0xff]
        %v238 = vld [vmem:[%s191 + $0x20] sm:$0xff]
        %v239 = vld [vmem:[%s191 + $0x28] sm:$0xff]
        %v240 = vld [vmem:[%s191 + $0x30] sm:$0xff]
        %v241 = vld [vmem:[%s191 + $0x38] sm:$0xff]
        %v242 = vld [vmem:[%s191 + $0x40] sm:$0xff]
        %v243 = vld [vmem:[%s191 + $0x48] sm:$0xff]
        %v244 = vld [vmem:[%s191 + $0x50] sm:$0xff]
        %v245 = vld [vmem:[%s191 + $0x58] sm:$0xff]
        %v246 = vld [vmem:[%s191 + $0x60] sm:$0xff]
        %v247 = vld [vmem:[%s191 + $0x68] sm:$0xff]
        %v248 = vld [vmem:[%s191 + $0x70] sm:$0xff]
        %v249 = vld [vmem:[%s191 + $0x78] sm:$0xff]
        %v250 = vld [vmem:[%s191 + $0x80] sm:$0xff]
        %v251 = vld [vmem:[%s191 + $0x88] sm:$0xff]
        %v252 = vld [vmem:[%s191 + $0x90] sm:$0xff]
        %v253 = vld [vmem:[%s191 + $0x98] sm:$0xff]
        %v254 = vld [vmem:[%s191 + $0xa0] sm:$0xff]
        %v255 = vld [vmem:[%s191 + $0xa8] sm:$0xff]
        %v256 = vld [vmem:[%s191 + $0xb0] sm:$0xff]
        %v257 = vld [vmem:[%s191 + $0xb8] sm:$0xff]
        %v258 = vld [vmem:[%s191 + $0xc0] sm:$0xff]
        %v259 = vld [vmem:[%s191 + $0xc8] sm:$0xff]
        %v260 = vld [vmem:[%s191 + $0xd0] sm:$0xff]
        %v261 = vld [vmem:[%s191 + $0xd8] sm:$0xff]
        %v262 = vld [vmem:[%s191 + $0xe0] sm:$0xff]
        %v263 = vld [vmem:[%s191 + $0xe8] sm:$0xff]
        %v264 = vld [vmem:[%s191 + $0xf0] sm:$0xff]
        %v265 = vld [vmem:[%s191 + $0xf8] sm:$0xff]
        %v266 = vld [vmem:[%s201] sm:$0xf]
        %v268 = vperm.slane %v266, 0
        %v269 = vperm.slane %v266, 1
        %v270 = vperm.slane %v266, 2
        %v271 = vperm.slane %v266, 3
        %v308 = vunpack.c.l.b16 %v234
        %v309 = vunpack.c.h.b16 %v234
        %v310 = vunpack.c.l.b16 %v235
        %v311 = vunpack.c.h.b16 %v235
        %v312 = vunpack.c.l.b16 %v236
        %v313 = vunpack.c.h.b16 %v236
        %v314 = vunpack.c.l.b16 %v237
        %v315 = vunpack.c.h.b16 %v237
        %v316 = vunpack.c.l.b16 %v238
        %v317 = vunpack.c.h.b16 %v238
        %v318 = vunpack.c.l.b16 %v239
        %v319 = vunpack.c.h.b16 %v239
        %v320 = vunpack.c.l.b16 %v240
        %v321 = vunpack.c.h.b16 %v240
        %v322 = vunpack.c.l.b16 %v241
        %v323 = vunpack.c.h.b16 %v241
        %v324 = vunpack.c.l.b16 %v242
        %v325 = vunpack.c.h.b16 %v242
        %v326 = vunpack.c.l.b16 %v243
        %v327 = vunpack.c.h.b16 %v243
        %v328 = vunpack.c.l.b16 %v244
        %v329 = vunpack.c.h.b16 %v244
        %v330 = vunpack.c.l.b16 %v245
        %v331 = vunpack.c.h.b16 %v245
        %v332 = vunpack.c.l.b16 %v246
        %v333 = vunpack.c.h.b16 %v246
        %v334 = vunpack.c.l.b16 %v247
        %v335 = vunpack.c.h.b16 %v247
        %v336 = vunpack.c.l.b16 %v248
        %v337 = vunpack.c.h.b16 %v248
        %v338 = vunpack.c.l.b16 %v249
        %v339 = vunpack.c.h.b16 %v249
        %v340 = vunpack.c.l.b16 %v250
        %v341 = vunpack.c.h.b16 %v250
        %v342 = vunpack.c.l.b16 %v251
        %v343 = vunpack.c.h.b16 %v251
        %v344 = vunpack.c.l.b16 %v252
        %v345 = vunpack.c.h.b16 %v252
        %v346 = vunpack.c.l.b16 %v253
        %v347 = vunpack.c.h.b16 %v253
        %v348 = vunpack.c.l.b16 %v254
        %v349 = vunpack.c.h.b16 %v254
        %v350 = vunpack.c.l.b16 %v255
        %v351 = vunpack.c.h.b16 %v255
        %v352 = vunpack.c.l.b16 %v256
        %v353 = vunpack.c.h.b16 %v256
        %v354 = vunpack.c.l.b16 %v257
        %v355 = vunpack.c.h.b16 %v257
        %v356 = vunpack.c.l.b16 %v258
        %v357 = vunpack.c.h.b16 %v258
        %v358 = vunpack.c.l.b16 %v259
        %v359 = vunpack.c.h.b16 %v259
        %v360 = vunpack.c.l.b16 %v260
        %v361 = vunpack.c.h.b16 %v260
        %v362 = vunpack.c.l.b16 %v261
        %v363 = vunpack.c.h.b16 %v261
        %v364 = vunpack.c.l.b16 %v262
        %v365 = vunpack.c.h.b16 %v262
        %v366 = vunpack.c.l.b16 %v263
        %v367 = vunpack.c.h.b16 %v263
        %v368 = vunpack.c.l.b16 %v264
        %v369 = vunpack.c.h.b16 %v264
        %v370 = vunpack.c.l.b16 %v265
        %v371 = vunpack.c.h.b16 %v265
        %v372 = vpack.c.b16 %v312, %v308
        %v373 = vpack.c.b16 %v313, %v309
        %v374 = vpack.c.b16 %v314, %v310
        %v375 = vpack.c.b16 %v315, %v311
        %v376 = vpack.c.b16 %v320, %v316
        %v377 = vpack.c.b16 %v321, %v317
        %v378 = vpack.c.b16 %v322, %v318
        %v379 = vpack.c.b16 %v323, %v319
        %v380 = vpack.c.b16 %v328, %v324
        %v381 = vpack.c.b16 %v329, %v325
        %v382 = vpack.c.b16 %v330, %v326
        %v383 = vpack.c.b16 %v331, %v327
        %v384 = vpack.c.b16 %v336, %v332
        %v385 = vpack.c.b16 %v337, %v333
        %v386 = vpack.c.b16 %v338, %v334
        %v387 = vpack.c.b16 %v339, %v335
        %v388 = vpack.c.b16 %v344, %v340
        %v389 = vpack.c.b16 %v345, %v341
        %v390 = vpack.c.b16 %v346, %v342
        %v391 = vpack.c.b16 %v347, %v343
        %v392 = vpack.c.b16 %v352, %v348
        %v393 = vpack.c.b16 %v353, %v349
        %v394 = vpack.c.b16 %v354, %v350
        %v395 = vpack.c.b16 %v355, %v351
        %v396 = vpack.c.b16 %v360, %v356
        %v397 = vpack.c.b16 %v361, %v357
        %v398 = vpack.c.b16 %v362, %v358
        %v399 = vpack.c.b16 %v363, %v359
        %v400 = vpack.c.b16 %v368, %v364
        %v401 = vpack.c.b16 %v369, %v365
        %v402 = vpack.c.b16 %v370, %v366
        %v403 = vpack.c.b16 %v371, %v367
        %436 = vmatpush.bf16.msra.mxu0 %v400
        %437 = vmatpush.bf16.msra.mxu0 %v396
        %438 = vmatpush.bf16.msra.mxu0 %v392
        %439 = vmatpush.bf16.msra.mxu0 %v388
        %440 = vmatpush.bf16.msra.mxu0 %v384
        %441 = vmatpush.bf16.msra.mxu0 %v380
        %442 = vmatpush.bf16.msra.mxu0 %v376
        %443 = vmatpush.bf16.msra.mxu0 %v372
        %444 = vmatmul.bf16.gmra.mxu0 %v233
        %v445 = vpop.f32.mrf.mxu0
        %v446 = vadd.f32 %v268, %v445
        %v447 = vpop.f32.mrf.mxu0
        %448 = vdwg.mxu0
        %449 = vmatpush.bf16.msra.mxu0 %v401
        %450 = vmatpush.bf16.msra.mxu0 %v397
        %451 = vmatpush.bf16.msra.mxu0 %v393
        %452 = vmatpush.bf16.msra.mxu0 %v389
        %453 = vmatpush.bf16.msra.mxu0 %v385
        %454 = vmatpush.bf16.msra.mxu0 %v381
        %455 = vmatpush.bf16.msra.mxu0 %v377
        %456 = vmatpush.bf16.msra.mxu0 %v373
        %457 = vmatmul.bf16.gmra.mxu0 %v233
        %v458 = vpop.f32.mrf.mxu0
        %v459 = vadd.f32 %v269, %v458
        %v460 = vpop.f32.mrf.mxu0
        %461 = vdwg.mxu0
        %462 = vmatpush.bf16.msra.mxu0 %v402
        %463 = vmatpush.bf16.msra.mxu0 %v398
        %464 = vmatpush.bf16.msra.mxu0 %v394
        %465 = vmatpush.bf16.msra.mxu0 %v390
        %466 = vmatpush.bf16.msra.mxu0 %v386
        %467 = vmatpush.bf16.msra.mxu0 %v382
        %468 = vmatpush.bf16.msra.mxu0 %v378
        %469 = vmatpush.bf16.msra.mxu0 %v374
        %470 = vmatmul.bf16.gmra.mxu0 %v233
        %v471 = vpop.f32.mrf.mxu0
        %v472 = vadd.f32 %v270, %v471
        %v473 = vpop.f32.mrf.mxu0
        %474 = vdwg.mxu0
        %475 = vmatpush.bf16.msra.mxu0 %v403
        %476 = vmatpush.bf16.msra.mxu0 %v399
        %477 = vmatpush.bf16.msra.mxu0 %v395
        %478 = vmatpush.bf16.msra.mxu0 %v391
        %479 = vmatpush.bf16.msra.mxu0 %v387
        %480 = vmatpush.bf16.msra.mxu0 %v383
        %481 = vmatpush.bf16.msra.mxu0 %v379
        %482 = vmatpush.bf16.msra.mxu0 %v375
        %483 = vmatmul.bf16.gmra.mxu0 %v233
        %v484 = vpop.f32.mrf.mxu0
        %v485 = vadd.f32 %v271, %v484
        %v486 = vpop.f32.mrf.mxu0
        %487 = vdwg.mxu0
        %488 = vst [vmem:[%s229] sm:$0xff] %v446
        %489 = vst [vmem:[%s229 + $0x8] sm:$0xff] %v459
        %490 = vst [vmem:[%s229 + $0x10] sm:$0xff] %v472
        %491 = vst [vmem:[%s229 + $0x18] sm:$0xff] %v485
        %s492 = sand.u32 %s104, 1
        %s493 = scalar_lea.sflag [#allocation4], %s492
        %s494 = sand.u32 %s104, 1
        %s495 = smul.addr %s494, 32
        %s496 = scalar_lea.vmem [#allocation7], %s495
        // Predicated region
        $region41: #{decoder_forward.3} parent=31 // pred_check
          %p497 = pneg %p114
        $region42: #{decoder_forward.3} parent=31 // pred_check_branch
          %499 = sbr.rel (%p497) target = $region44
        $region43: #{decoder_forward.3} parent=31 // pred_region
          %s500 = smul.u32 4, %s23
          %502 = vsyncadd %s493, 0
          %s503 = smul.addr %s500, 8
          %s504 = scalar_lea.hbm %s3, %s503
          %s506 = sshll.u32 %s496, 4
          %s507 = int_to_ptr.vmem [resolvable:$true] %s506
          %s508 = sshll.u32 %s504, 4
          %s509 = int_to_ptr.hbm [resolvable:$true] %s508
          %511 = dma.vmem_to_hbm [thread:$0]  %s507, 512, %s509, %s493
        $region44: #{decoder_forward.3} parent=31 // pred_fallthru
          _
      $region32: #{decoder_forward.3} parent=5 // pred_fallthru
        _
      %p512 = scmp.le.s32.totalorder 2, %s18
      // Predicated region
      $region45: #{decoder_forward.3} parent=5 // pred_check
        %p513 = pneg %p512
      $region46: #{decoder_forward.3} parent=5 // pred_check_branch
        %515 = sbr.rel (%p513) target = $region48
      $region47: #{decoder_forward.3} parent=5 // pred_region
        %s516 = ssub.s32 %s18, 2
        // Predicated region
        $region49: #{decoder_forward.3} parent=47 // pred_check
          %p517 = pneg %p120
        $region50: #{decoder_forward.3} parent=47 // pred_check_branch
          %519 = sbr.rel (%p517) target = $region52
        $region51: #{decoder_forward.3} parent=47 // pred_region
          %s520 = sand.u32 %s105, 1
          %s521 = scalar_lea.sflag [#allocation4], %s520
          %s522 = sand.u32 %s105, 1
          %s523 = smul.addr %s522, 32
          %s524 = scalar_lea.vmem [#allocation7], %s523
          %526 = dma.done %s521, 512
        $region52: #{decoder_forward.3} parent=47 // pred_fallthru
          _
      $region48: #{decoder_forward.3} parent=5 // pred_fallthru
        _
    $region6: #{decoder_forward.3} parent=1 // loop_footer
      %s22 = sadd.s32 1, %s18
    $region7: #{decoder_forward.3} parent=1 // loop_footer_branch
      %17 = sbr.rel target = $region3
    $region8: #{decoder_forward.3} parent=1 // loop_exit
      _
    %527 = vsyncpa [#allocation3], 1
    %s528 = scalar_lea.sflag [#allocation3], 1
    %529 = vsyncpa %s528, 1
    %530 = vsyncpa [#allocation6], 1
    %s531 = scalar_lea.sflag [#allocation6], 1
    %532 = vsyncpa %s531, 1
    %533 = vsyncpa [#allocation4], 1
    %s534 = scalar_lea.sflag [#allocation4], 1
    %535 = vsyncpa %s534, 1

// kernel: decoder_forward.2
$region0: #{decoder_forward.2}
  #allocation0 [shape = 'u32[]', space=smem, size = 0x4, offset = 0x4, fixed_abs, tag = 'smem constant byte address 0x4 - core index']
  #allocation1 [shape = 'u32[72,128]{1,0:T(1,128)}', space=vmem, size = 0x9000, scoped, tag = 'internal scratch']
  #allocation2 [shape = 'f32[8,128]{1,0:T(8,128)}', space=vmem, size = 0x1000, scoped, tag = 'scratch operand']
  #allocation3 [shape = 's32[8]{0}', space=sflag, size = 0x20, scoped, tag = 'scratch operand']
  #allocation4 [shape = 's32[1]{0}', space=sflag, size = 0x4, scoped, tag = 'scoped memory for decoder_forward.2']
  #allocation5 [shape = 'u8[512]{0}', space=smem, size = 0x200, scoped, tag = 'prefetched SMEM operand 0']
  #allocation22 [shape = 's32[]', space=sflag, size = 0x4, offset = 0, fixed_abs, tag = 'sflag constant byte address 0x0 - dummy sync flag']
  #allocation23 [shape = 's32[]', space=sflag, size = 0x4, offset = 0, fixed_abs, tag = 'sflag constant byte address 0x0 - dummy sync flag']
  #allocation24 [shape = 'u32[]', space=smem, size = 0x4, offset = 0x44, fixed_abs, tag = 'smem constant byte address 0x44 - assertion arg 0']
  #allocation25 [shape = 'u32[]', space=smem, size = 0x4, offset = 0x48, fixed_abs, tag = 'smem constant byte address 0x48 - assertion arg 1']
  #allocation26 [shape = 's32[]', space=sflag, size = 0x4, offset = 0, fixed_abs, tag = 'sflag constant byte address 0x0 - dummy sync flag']
  #allocation27 [shape = 's32[]', space=sflag, size = 0x4, offset = 0, fixed_abs, tag = 'sflag constant byte address 0x0 - dummy sync flag']
  #allocation28 [shape = 's32[]', space=sflag, size = 0x4, offset = 0, fixed_abs, tag = 'sflag constant byte address 0x0 - dummy sync flag']
  #allocation29 [shape = 's32[]', space=sflag, size = 0x4, offset = 0, fixed_abs, tag = 'sflag constant byte address 0x0 - dummy sync flag']
  #allocation30 [shape = 's32[]', space=sflag, size = 0x4, offset = 0, fixed_abs, tag = 'sflag constant byte address 0x0 - dummy sync flag']
  #allocation31 [shape = 's32[]', space=sflag, size = 0x4, offset = 0, fixed_abs, tag = 'sflag constant byte address 0x0 - dummy sync flag']
  #allocation32 [shape = 's32[]', space=sflag, size = 0x4, offset = 0, fixed_abs, tag = 'sflag constant byte address 0x0 - dummy sync flag']
  #allocation33 [shape = 's32[]', space=sflag, size = 0x4, offset = 0, fixed_abs, tag = 'sflag constant byte address 0x0 - dummy sync flag']
  #allocation34 [shape = 's32[]', space=sflag, size = 0x4, offset = 0, fixed_abs, tag = 'sflag constant byte address 0x0 - dummy sync flag']
  #allocation35 [shape = 's32[]', space=sflag, size = 0x4, offset = 0, fixed_abs, tag = 'sflag constant byte address 0x0 - dummy sync flag']
  #allocation36 [shape = 's32[]', space=sflag, size = 0x4, offset = 0, fixed_abs, tag = 'sflag constant byte address 0x0 - dummy sync flag']
  #allocation37 [shape = 's32[]', space=sflag, size = 0x4, offset = 0, fixed_abs, tag = 'sflag constant byte address 0x0 - dummy sync flag']
  #allocation38 [shape = 's32[]', space=sflag, size = 0x4, offset = 0, fixed_abs, tag = 'sflag constant byte address 0x0 - dummy sync flag']
  #allocation39 [shape = 's32[]', space=sflag, size = 0x4, offset = 0, fixed_abs, tag = 'sflag constant byte address 0x0 - dummy sync flag']
  %s0 = inlined_call_operand.vmem [shape: s32[8], index: 0, kind: input, shape index: {}]
  %s1 = inlined_call_operand.hbm [shape: f32[1280,128], index: 1, kind: input, shape index: {}]
  %s2 = inlined_call_operand.hbm [shape: f32[2,8,128], index: 2, kind: input, shape index: {}]
  %s3 = inlined_call_operand.hbm [shape: bf16[2,128,384], index: 3, kind: input, shape index: {}]
  %s4 = inlined_call_operand.hbm [shape: bf16[2,128,384], index: 4, kind: input, shape index: {}]
  %s5 = inlined_call_operand.hbm [shape: f32[2,1,384], index: 5, kind: input, shape index: {}]
  %s6 = inlined_call_operand.hbm [shape: f32[2,1,384], index: 6, kind: input, shape index: {}]
  %s7 = inlined_call_operand.hbm [shape: bf16[128,128], index: 7, kind: input, shape index: {}]
  %s8 = inlined_call_operand.hbm [shape: f32[1,128], index: 8, kind: input, shape index: {}]
  %s9 = inlined_call_operand.hbm [shape: bf16[128,128], index: 9, kind: input, shape index: {}]
  %s10 = inlined_call_operand.hbm [shape: f32[1,128], index: 10, kind: input, shape index: {}]
  %s11 = inlined_call_operand.hbm [shape: f32[2,8,128], index: 11, kind: output, shape index: {0}]
  %s12 = inlined_call_operand.vmem [shape: bf16[8,128], index: 12, kind: output, shape index: {1}]
  %13 = xla_tuple %s11, %s12
  %s14 = sld [smem:[#allocation0]]
  $region122: #{decoder_forward.2} parent=0
    _
  %s16 = ssub.s32 1, %s14
  %s17 = scalar_select 0, %s16, %s14
  %s19 = sshll.u32 %s0, 4
  %s20 = int_to_ptr.vmem [resolvable:$true] %s19
  %22 = dma.vmem_to_smem %s20, 16, [#allocation5], [#allocation4]
  %24 = dma.done [#allocation4], 16
  %25 = sfence
  $region1: #{decoder_forward.2} parent=0
    #allocation6 [shape = 'u8[8192]{0}', space=vmem, size = 0x2000, scoped, tag = 'input window, operand 2, single buffered']
    #allocation7 [shape = 's32[1]{0}', space=sflag, size = 0x4, scoped, tag = 'scoped memory for decoder_forward.2']
    #allocation8 [shape = 's32[1]{0}', space=sflag, size = 0x4, scoped, tag = 'scoped memory for decoder_forward.2']
    #allocation9 [shape = 'u8[196608]{0}', space=vmem, size = 0x30000, scoped, tag = 'input window, operand 3, single buffered']
    #allocation10 [shape = 's32[1]{0}', space=sflag, size = 0x4, scoped, tag = 'scoped memory for decoder_forward.2']
    #allocation11 [shape = 'u8[196608]{0}', space=vmem, size = 0x30000, scoped, tag = 'input window, operand 4, single buffered']
    #allocation12 [shape = 'u8[3072]{0}', space=vmem, size = 0xc00, scoped, tag = 'input window, operand 5, single buffered']
    #allocation13 [shape = 's32[1]{0}', space=sflag, size = 0x4, scoped, tag = 'scoped memory for decoder_forward.2']
    #allocation14 [shape = 'u8[3072]{0}', space=vmem, size = 0xc00, scoped, tag = 'input window, operand 6, single buffered']
    #allocation15 [shape = 'u8[32768]{0}', space=vmem, size = 0x8000, scoped, tag = 'input window, operand 7, single buffered']
    #allocation16 [shape = 's32[1]{0}', space=sflag, size = 0x4, scoped, tag = 'scoped memory for decoder_forward.2']
    #allocation17 [shape = 'u8[512]{0}', space=vmem, size = 0x400, scoped, tag = 'input window, operand 8, single buffered']
    #allocation18 [shape = 'u8[32768]{0}', space=vmem, size = 0x8000, scoped, tag = 'input window, operand 9, single buffered']
    #allocation19 [shape = 's32[1]{0}', space=sflag, size = 0x4, scoped, tag = 'scoped memory for decoder_forward.2']
    #allocation20 [shape = 'u8[512]{0}', space=vmem, size = 0x400, scoped, tag = 'input window, operand 10, single buffered']
    #allocation21 [shape = 'u8[8192]{0}', space=vmem, size = 0x2000, scoped, tag = 'output window, operand 0, single buffered']
    %26 = vsyncpa [#allocation7], 0
    %27 = vsyncpa [#allocation10], 0
    %28 = vsyncpa [#allocation13], 0
    %29 = vsyncpa [#allocation16], 0
    %30 = vsyncpa [#allocation19], 0
    %31 = vsyncpa [#allocation8], 0
    // Predicated region
    $region2: #{decoder_forward.2} parent=1 // pred_check
      _
    $region3: #{decoder_forward.2} parent=1 // pred_check_branch
      %33 = sbr.rel (0) target = $region5
    $region4: #{decoder_forward.2} parent=1 // pred_region
      %35 = vsyncadd [#allocation7], 0
      %s36 = sshll.u32 %s2, 4
      %s37 = int_to_ptr.hbm [resolvable:$true] %s36
      %s38 = sshll.u32 [#allocation6], 4
      %s39 = int_to_ptr.vmem [resolvable:$true] %s38
      %44 = dma.hbm_to_vmem [thread:$0]  %s37, 256, %s39, [#allocation7], 128, 128, 8
    $region5: #{decoder_forward.2} parent=1 // pred_fallthru
      _
    // Predicated region
    $region6: #{decoder_forward.2} parent=1 // pred_check
      _
    $region7: #{decoder_forward.2} parent=1 // pred_check_branch
      %46 = sbr.rel (0) target = $region9
    $region8: #{decoder_forward.2} parent=1 // pred_region
      %48 = vsyncadd [#allocation10], 0
      %s49 = sshll.u32 %s3, 4
      %s50 = int_to_ptr.hbm [resolvable:$true] %s49
      %s51 = sshll.u32 [#allocation9], 4
      %s52 = int_to_ptr.vmem [resolvable:$true] %s51
      %57 = dma.hbm_to_vmem [thread:$0]  %s50, 6144, %s52, [#allocation10], 192, 192, 12
    $region9: #{decoder_forward.2} parent=1 // pred_fallthru
      _
    // Predicated region
    $region10: #{decoder_forward.2} parent=1 // pred_check
      _
    $region11: #{decoder_forward.2} parent=1 // pred_check_branch
      %59 = sbr.rel (0) target = $region13
    $region12: #{decoder_forward.2} parent=1 // pred_region
      %61 = vsyncadd [#allocation10], 0
      %s62 = sshll.u32 %s4, 4
      %s63 = int_to_ptr.hbm [resolvable:$true] %s62
      %s64 = sshll.u32 [#allocation11], 4
      %s65 = int_to_ptr.vmem [resolvable:$true] %s64
      %70 = dma.hbm_to_vmem [thread:$0]  %s63, 6144, %s65, [#allocation10], 192, 192, 12
    $region13: #{decoder_forward.2} parent=1 // pred_fallthru
      _
    // Predicated region
    $region14: #{decoder_forward.2} parent=1 // pred_check
      _
    $region15: #{decoder_forward.2} parent=1 // pred_check_branch
      %72 = sbr.rel (0) target = $region17
    $region16: #{decoder_forward.2} parent=1 // pred_region
      %74 = vsyncadd [#allocation13], 0
      %s75 = sshll.u32 %s5, 4
      %s76 = int_to_ptr.hbm [resolvable:$true] %s75
      %s77 = sshll.u32 [#allocation12], 4
      %s78 = int_to_ptr.vmem [resolvable:$true] %s77
      %83 = dma.hbm_to_vmem [thread:$0]  %s76, 96, %s78, [#allocation13], 48, 48, 3
    $region17: #{decoder_forward.2} parent=1 // pred_fallthru
      _
    // Predicated region
    $region18: #{decoder_forward.2} parent=1 // pred_check
      _
    $region19: #{decoder_forward.2} parent=1 // pred_check_branch
      %85 = sbr.rel (0) target = $region21
    $region20: #{decoder_forward.2} parent=1 // pred_region
      %87 = vsyncadd [#allocation13], 0
      %s88 = sshll.u32 %s6, 4
      %s89 = int_to_ptr.hbm [resolvable:$true] %s88
      %s90 = sshll.u32 [#allocation14], 4
      %s91 = int_to_ptr.vmem [resolvable:$true] %s90
      %96 = dma.hbm_to_vmem [thread:$0]  %s89, 96, %s91, [#allocation13], 48, 48, 3
    $region21: #{decoder_forward.2} parent=1 // pred_fallthru
      _
    // Predicated region
    $region22: #{decoder_forward.2} parent=1 // pred_check
      _
    $region23: #{decoder_forward.2} parent=1 // pred_check_branch
      %98 = sbr.rel (0) target = $region25
    $region24: #{decoder_forward.2} parent=1 // pred_region
      %100 = vsyncadd [#allocation16], 0
      %s101 = sshll.u32 %s7, 4
      %s102 = int_to_ptr.hbm [resolvable:$true] %s101
      %s103 = sshll.u32 [#allocation15], 4
      %s104 = int_to_ptr.vmem [resolvable:$true] %s103
      %109 = dma.hbm_to_vmem [thread:$0]  %s102, 1024, %s104, [#allocation16], 64, 64, 4
    $region25: #{decoder_forward.2} parent=1 // pred_fallthru
      _
    // Predicated region
    $region26: #{decoder_forward.2} parent=1 // pred_check
      _
    $region27: #{decoder_forward.2} parent=1 // pred_check_branch
      %111 = sbr.rel (0) target = $region29
    $region28: #{decoder_forward.2} parent=1 // pred_region
      %113 = vsyncadd [#allocation16], 0
      %s115 = sshll.u32 %s8, 4
      %s116 = int_to_ptr.hbm [resolvable:$true] %s115
      %s117 = sshll.u32 [#allocation17], 4
      %s118 = int_to_ptr.vmem [resolvable:$true] %s117
      %120 = dma.hbm_to_vmem [thread:$0]  %s116, 16, %s118, [#allocation16]
    $region29: #{decoder_forward.2} parent=1 // pred_fallthru
      _
    // Predicated region
    $region30: #{decoder_forward.2} parent=1 // pred_check
      _
    $region31: #{decoder_forward.2} parent=1 // pred_check_branch
      %122 = sbr.rel (0) target = $region33
    $region32: #{decoder_forward.2} parent=1 // pred_region
      %124 = vsyncadd [#allocation19], 0
      %s125 = sshll.u32 %s9, 4
      %s126 = int_to_ptr.hbm [resolvable:$true] %s125
      %s127 = sshll.u32 [#allocation18], 4
      %s128 = int_to_ptr.vmem [resolvable:$true] %s127
      %133 = dma.hbm_to_vmem [thread:$0]  %s126, 1024, %s128, [#allocation19], 64, 64, 4
    $region33: #{decoder_forward.2} parent=1 // pred_fallthru
      _
    // Predicated region
    $region34: #{decoder_forward.2} parent=1 // pred_check
      _
    $region35: #{decoder_forward.2} parent=1 // pred_check_branch
      %135 = sbr.rel (0) target = $region37
    $region36: #{decoder_forward.2} parent=1 // pred_region
      %137 = vsyncadd [#allocation19], 0
      %s139 = sshll.u32 %s10, 4
      %s140 = int_to_ptr.hbm [resolvable:$true] %s139
      %s141 = sshll.u32 [#allocation20], 4
      %s142 = int_to_ptr.vmem [resolvable:$true] %s141
      %144 = dma.hbm_to_vmem [thread:$0]  %s140, 16, %s142, [#allocation19]
    $region37: #{decoder_forward.2} parent=1 // pred_fallthru
      _
    // Predicated region
    $region38: #{decoder_forward.2} parent=1 // pred_check
      _
    $region39: #{decoder_forward.2} parent=1 // pred_check_branch
      %146 = sbr.rel (0) target = $region41
    $region40: #{decoder_forward.2} parent=1 // pred_region
      %148 = dma.done [#allocation7], 256
    $region41: #{decoder_forward.2} parent=1 // pred_fallthru
      _
    // Predicated region
    $region42: #{decoder_forward.2} parent=1 // pred_check
      _
    $region43: #{decoder_forward.2} parent=1 // pred_check_branch
      %150 = sbr.rel (0) target = $region45
    $region44: #{decoder_forward.2} parent=1 // pred_region
      %152 = dma.done [#allocation10], 6144
    $region45: #{decoder_forward.2} parent=1 // pred_fallthru
      _
    // Predicated region
    $region46: #{decoder_forward.2} parent=1 // pred_check
      _
    $region47: #{decoder_forward.2} parent=1 // pred_check_branch
      %154 = sbr.rel (0) target = $region49
    $region48: #{decoder_forward.2} parent=1 // pred_region
      %156 = dma.done [#allocation10], 6144
    $region49: #{decoder_forward.2} parent=1 // pred_fallthru
      _
    // Predicated region
    $region50: #{decoder_forward.2} parent=1 // pred_check
      _
    $region51: #{decoder_forward.2} parent=1 // pred_check_branch
      %158 = sbr.rel (0) target = $region53
    $region52: #{decoder_forward.2} parent=1 // pred_region
      %160 = dma.done [#allocation13], 96
    $region53: #{decoder_forward.2} parent=1 // pred_fallthru
      _
    // Predicated region
    $region54: #{decoder_forward.2} parent=1 // pred_check
      _
    $region55: #{decoder_forward.2} parent=1 // pred_check_branch
      %162 = sbr.rel (0) target = $region57
    $region56: #{decoder_forward.2} parent=1 // pred_region
      %164 = dma.done [#allocation13], 96
    $region57: #{decoder_forward.2} parent=1 // pred_fallthru
      _
    // Predicated region
    $region58: #{decoder_forward.2} parent=1 // pred_check
      _
    $region59: #{decoder_forward.2} parent=1 // pred_check_branch
      %166 = sbr.rel (0) target = $region61
    $region60: #{decoder_forward.2} parent=1 // pred_region
      %168 = dma.done [#allocation16], 1024
    $region61: #{decoder_forward.2} parent=1 // pred_fallthru
      _
    // Predicated region
    $region62: #{decoder_forward.2} parent=1 // pred_check
      _
    $region63: #{decoder_forward.2} parent=1 // pred_check_branch
      %170 = sbr.rel (0) target = $region65
    $region64: #{decoder_forward.2} parent=1 // pred_region
      %172 = dma.done [#allocation16], 16
    $region65: #{decoder_forward.2} parent=1 // pred_fallthru
      _
    // Predicated region
    $region66: #{decoder_forward.2} parent=1 // pred_check
      _
    $region67: #{decoder_forward.2} parent=1 // pred_check_branch
      %174 = sbr.rel (0) target = $region69
    $region68: #{decoder_forward.2} parent=1 // pred_region
      %176 = dma.done [#allocation19], 1024
    $region69: #{decoder_forward.2} parent=1 // pred_fallthru
      _
    // Predicated region
    $region70: #{decoder_forward.2} parent=1 // pred_check
      _
    $region71: #{decoder_forward.2} parent=1 // pred_check_branch
      %178 = sbr.rel (0) target = $region73
    $region72: #{decoder_forward.2} parent=1 // pred_region
      %180 = dma.done [#allocation19], 16
    $region73: #{decoder_forward.2} parent=1 // pred_fallthru
      _
    %s181 = sld [smem:[#allocation5]]
    %s182 = scalar_lea.hbm %s1, %s181
    // Predicated region
    $region74: #{decoder_forward.2} parent=1 // pred_check
      _
    $region75: #{decoder_forward.2} parent=1 // pred_check_branch
      %184 = sbr.rel target = $region77
    $region76: #{decoder_forward.2} parent=1 // pred_region
      %185 = sst [smem:[#allocation24]] [#allocation23]
      %186 = sst [smem:[#allocation25]] [#allocation22]
    $region77: #{decoder_forward.2} parent=1 // pred_fallthru
      _
    %188 = shalt.err (0)
    %s190 = sshll.u32 %s182, 4
    %s191 = int_to_ptr.hbm [resolvable:$true] %s190
    %s192 = sshll.u32 [#allocation2], 4
    %s193 = int_to_ptr.vmem [resolvable:$true] %s192
    %195 = dma.hbm_to_vmem [thread:$0]  %s191, 16, %s193, [#allocation3]
    %s196 = sld [smem:[#allocation5 + $0x1]]
    %s197 = scalar_lea.hbm %s1, %s196
    %s198 = scalar_lea.vmem [#allocation2], 1
    %s199 = scalar_lea.sflag [#allocation3], 1
    // Predicated region
    $region78: #{decoder_forward.2} parent=1 // pred_check
      _
    $region79: #{decoder_forward.2} parent=1 // pred_check_branch
      %201 = sbr.rel target = $region81
    $region80: #{decoder_forward.2} parent=1 // pred_region
      %202 = sst [smem:[#allocation24]] [#allocation27]
      %203 = sst [smem:[#allocation25]] [#allocation26]
    $region81: #{decoder_forward.2} parent=1 // pred_fallthru
      _
    %205 = shalt.err (0)
    %s207 = sshll.u32 %s197, 4
    %s208 = int_to_ptr.hbm [resolvable:$true] %s207
    %s209 = sshll.u32 %s198, 4
    %s210 = int_to_ptr.vmem [resolvable:$true] %s209
    %212 = dma.hbm_to_vmem [thread:$0]  %s208, 16, %s210, %s199
    %s213 = sld [smem:[#allocation5 + $0x2]]
    %s214 = scalar_lea.hbm %s1, %s213
    %s215 = scalar_lea.vmem [#allocation2], 2
    %s216 = scalar_lea.sflag [#allocation3], 2
    // Predicated region
    $region82: #{decoder_forward.2} parent=1 // pred_check
      _
    $region83: #{decoder_forward.2} parent=1 // pred_check_branch
      %218 = sbr.rel target = $region85
    $region84: #{decoder_forward.2} parent=1 // pred_region
      %219 = sst [smem:[#allocation24]] [#allocation29]
      %220 = sst [smem:[#allocation25]] [#allocation28]
    $region85: #{decoder_forward.2} parent=1 // pred_fallthru
      _
    %222 = shalt.err (0)
    %s224 = sshll.u32 %s214, 4
    %s225 = int_to_ptr.hbm [resolvable:$true] %s224
    %s226 = sshll.u32 %s215, 4
    %s227 = int_to_ptr.vmem [resolvable:$true] %s226
    %229 = dma.hbm_to_vmem [thread:$0]  %s225, 16, %s227, %s216
    %s230 = sld [smem:[#allocation5 + $0x3]]
    %s231 = scalar_lea.hbm %s1, %s230
    %s232 = scalar_lea.vmem [#allocation2], 3
    %s233 = scalar_lea.sflag [#allocation3], 3
    // Predicated region
    $region86: #{decoder_forward.2} parent=1 // pred_check
      _
    $region87: #{decoder_forward.2} parent=1 // pred_check_branch
      %235 = sbr.rel target = $region89
    $region88: #{decoder_forward.2} parent=1 // pred_region
      %236 = sst [smem:[#allocation24]] [#allocation31]
      %237 = sst [smem:[#allocation25]] [#allocation30]
    $region89: #{decoder_forward.2} parent=1 // pred_fallthru
      _
    %239 = shalt.err (0)
    %s241 = sshll.u32 %s231, 4
    %s242 = int_to_ptr.hbm [resolvable:$true] %s241
    %s243 = sshll.u32 %s232, 4
    %s244 = int_to_ptr.vmem [resolvable:$true] %s243
    %246 = dma.hbm_to_vmem [thread:$0]  %s242, 16, %s244, %s233
    %s247 = sld [smem:[#allocation5 + $0x4]]
    %s248 = scalar_lea.hbm %s1, %s247
    %s249 = scalar_lea.vmem [#allocation2], 4
    %s250 = scalar_lea.sflag [#allocation3], 4
    // Predicated region
    $region90: #{decoder_forward.2} parent=1 // pred_check
      _
    $region91: #{decoder_forward.2} parent=1 // pred_check_branch
      %252 = sbr.rel target = $region93
    $region92: #{decoder_forward.2} parent=1 // pred_region
      %253 = sst [smem:[#allocation24]] [#allocation33]
      %254 = sst [smem:[#allocation25]] [#allocation32]
    $region93: #{decoder_forward.2} parent=1 // pred_fallthru
      _
    %256 = shalt.err (0)
    %s258 = sshll.u32 %s248, 4
    %s259 = int_to_ptr.hbm [resolvable:$true] %s258
    %s260 = sshll.u32 %s249, 4
    %s261 = int_to_ptr.vmem [resolvable:$true] %s260
    %263 = dma.hbm_to_vmem [thread:$0]  %s259, 16, %s261, %s250
    %s264 = sld [smem:[#allocation5 + $0x5]]
    %s265 = scalar_lea.hbm %s1, %s264
    %s266 = scalar_lea.vmem [#allocation2], 5
    %s267 = scalar_lea.sflag [#allocation3], 5
    // Predicated region
    $region94: #{decoder_forward.2} parent=1 // pred_check
      _
    $region95: #{decoder_forward.2} parent=1 // pred_check_branch
      %269 = sbr.rel target = $region97
    $region96: #{decoder_forward.2} parent=1 // pred_region
      %270 = sst [smem:[#allocation24]] [#allocation35]
      %271 = sst [smem:[#allocation25]] [#allocation34]
    $region97: #{decoder_forward.2} parent=1 // pred_fallthru
      _
    %273 = shalt.err (0)
    %s275 = sshll.u32 %s265, 4
    %s276 = int_to_ptr.hbm [resolvable:$true] %s275
    %s277 = sshll.u32 %s266, 4
    %s278 = int_to_ptr.vmem [resolvable:$true] %s277
    %280 = dma.hbm_to_vmem [thread:$0]  %s276, 16, %s278, %s267
    %s281 = sld [smem:[#allocation5 + $0x6]]
    %s282 = scalar_lea.hbm %s1, %s281
    %s283 = scalar_lea.vmem [#allocation2], 6
    %s284 = scalar_lea.sflag [#allocation3], 6
    // Predicated region
    $region98: #{decoder_forward.2} parent=1 // pred_check
      _
    $region99: #{decoder_forward.2} parent=1 // pred_check_branch
      %286 = sbr.rel target = $region101
    $region100: #{decoder_forward.2} parent=1 // pred_region
      %287 = sst [smem:[#allocation24]] [#allocation37]
      %288 = sst [smem:[#allocation25]] [#allocation36]
    $region101: #{decoder_forward.2} parent=1 // pred_fallthru
      _
    %290 = shalt.err (0)
    %s292 = sshll.u32 %s282, 4
    %s293 = int_to_ptr.hbm [resolvable:$true] %s292
    %s294 = sshll.u32 %s283, 4
    %s295 = int_to_ptr.vmem [resolvable:$true] %s294
    %297 = dma.hbm_to_vmem [thread:$0]  %s293, 16, %s295, %s284
    %s298 = sld [smem:[#allocation5 + $0x7]]
    %s299 = scalar_lea.hbm %s1, %s298
    %s300 = scalar_lea.vmem [#allocation2], 7
    %s301 = scalar_lea.sflag [#allocation3], 7
    // Predicated region
    $region102: #{decoder_forward.2} parent=1 // pred_check
      _
    $region103: #{decoder_forward.2} parent=1 // pred_check_branch
      %303 = sbr.rel target = $region105
    $region104: #{decoder_forward.2} parent=1 // pred_region
      %304 = sst [smem:[#allocation24]] [#allocation39]
      %305 = sst [smem:[#allocation25]] [#allocation38]
    $region105: #{decoder_forward.2} parent=1 // pred_fallthru
      _
    %307 = shalt.err (0)
    %s309 = sshll.u32 %s299, 4
    %s310 = int_to_ptr.hbm [resolvable:$true] %s309
    %s311 = sshll.u32 %s300, 4
    %s312 = int_to_ptr.vmem [resolvable:$true] %s311
    %314 = dma.hbm_to_vmem [thread:$0]  %s310, 16, %s312, %s301
    %s315 = smul.u32 1, 1
    %s316 = sshll.u32 %s315, 4
    %317 = dma.done [#allocation3], %s316
    %s318 = sshll.u32 %s315, 4
    %319 = dma.done %s199, %s318
    %s320 = sshll.u32 %s315, 4
    %321 = dma.done %s216, %s320
    %s322 = sshll.u32 %s315, 4
    %323 = dma.done %s233, %s322
    %s324 = sshll.u32 %s315, 4
    %325 = dma.done %s250, %s324
    %s326 = sshll.u32 %s315, 4
    %327 = dma.done %s267, %s326
    %s328 = sshll.u32 %s315, 4
    %329 = dma.done %s284, %s328
    %s330 = sshll.u32 %s315, 4
    %331 = dma.done %s301, %s330
    %v332 = vld [vmem:[#allocation6] sm:$0xff]
    %v333 = vld [vmem:[#allocation6 + $0x8] sm:$0xff]
    %v334 = vld [vmem:[#allocation2] sm:$0xff]
    %v335 = vpack.c.bf16 %v334, %v334
    %v336 = vld [vmem:[#allocation9] sm:$0xff]
    %v337 = vld [vmem:[#allocation9 + $0x8] sm:$0xf]
    %v338 = vld [vmem:[#allocation9 + $0xc] sm:$0xff]
    %v339 = vld [vmem:[#allocation9 + $0x14] sm:$0xf]
    %v340 = vld [vmem:[#allocation9 + $0x18] sm:$0xff]
    %v341 = vld [vmem:[#allocation9 + $0x20] sm:$0xf]
    %v342 = vld [vmem:[#allocation9 + $0x24] sm:$0xff]
    %v343 = vld [vmem:[#allocation9 + $0x2c] sm:$0xf]
    %v344 = vld [vmem:[#allocation9 + $0x30] sm:$0xff]
    %v345 = vld [vmem:[#allocation9 + $0x38] sm:$0xf]
    %v346 = vld [vmem:[#allocation9 + $0x3c] sm:$0xff]
    %v347 = vld [vmem:[#allocation9 + $0x44] sm:$0xf]
    %v348 = vld [vmem:[#allocation9 + $0x48] sm:$0xff]
    %v349 = vld [vmem:[#allocation9 + $0x50] sm:$0xf]
    %v350 = vld [vmem:[#allocation9 + $0x54] sm:$0xff]
    %v351 = vld [vmem:[#allocation9 + $0x5c] sm:$0xf]
    %v352 = vld [vmem:[#allocation9 + $0x60] sm:$0xff]
    %v353 = vld [vmem:[#allocation9 + $0x68] sm:$0xf]
    %v354 = vld [vmem:[#allocation9 + $0x6c] sm:$0xff]
    %v355 = vld [vmem:[#allocation9 + $0x74] sm:$0xf]
    %v356 = vld [vmem:[#allocation9 + $0x78] sm:$0xff]
    %v357 = vld [vmem:[#allocation9 + $0x80] sm:$0xf]
    %v358 = vld [vmem:[#allocation9 + $0x84] sm:$0xff]
    %v359 = vld [vmem:[#allocation9 + $0x8c] sm:$0xf]
    %v360 = vld [vmem:[#allocation9 + $0x90] sm:$0xff]
    %v361 = vld [vmem:[#allocation9 + $0x98] sm:$0xf]
    %v362 = vld [vmem:[#allocation9 + $0x9c] sm:$0xff]
    %v363 = vld [vmem:[#allocation9 + $0xa4] sm:$0xf]
    %v364 = vld [vmem:[#allocation9 + $0xa8] sm:$0xff]
    %v365 = vld [vmem:[#allocation9 + $0xb0] sm:$0xf]
    %v366 = vld [vmem:[#allocation9 + $0xb4] sm:$0xff]
    %v367 = vld [vmem:[#allocation9 + $0xbc] sm:$0xf]
    %v368 = vld [vmem:[#allocation12] sm:$0x7]
    %v370 = vperm.slane %v368, 0
    %v371 = vperm.slane %v368, 1
    %v372 = vperm.slane %v368, 2
    %v408 = vunpack.c.l.b16 %v336
    %v409 = vunpack.c.h.b16 %v336
    %v410 = vunpack.c.l.b16 %v337
    %v411 = vunpack.c.l.b16 %v338
    %v412 = vunpack.c.h.b16 %v338
    %v413 = vunpack.c.l.b16 %v339
    %v414 = vunpack.c.l.b16 %v340
    %v415 = vunpack.c.h.b16 %v340
    %v416 = vunpack.c.l.b16 %v341
    %v417 = vunpack.c.l.b16 %v342
    %v418 = vunpack.c.h.b16 %v342
    %v419 = vunpack.c.l.b16 %v343
    %v420 = vunpack.c.l.b16 %v344
    %v421 = vunpack.c.h.b16 %v344
    %v422 = vunpack.c.l.b16 %v345
    %v423 = vunpack.c.l.b16 %v346
    %v424 = vunpack.c.h.b16 %v346
    %v425 = vunpack.c.l.b16 %v347
    %v426 = vunpack.c.l.b16 %v348
    %v427 = vunpack.c.h.b16 %v348
    %v428 = vunpack.c.l.b16 %v349
    %v429 = vunpack.c.l.b16 %v350
    %v430 = vunpack.c.h.b16 %v350
    %v431 = vunpack.c.l.b16 %v351
    %v432 = vunpack.c.l.b16 %v352
    %v433 = vunpack.c.h.b16 %v352
    %v434 = vunpack.c.l.b16 %v353
    %v435 = vunpack.c.l.b16 %v354
    %v436 = vunpack.c.h.b16 %v354
    %v437 = vunpack.c.l.b16 %v355
    %v438 = vunpack.c.l.b16 %v356
    %v439 = vunpack.c.h.b16 %v356
    %v440 = vunpack.c.l.b16 %v357
    %v441 = vunpack.c.l.b16 %v358
    %v442 = vunpack.c.h.b16 %v358
    %v443 = vunpack.c.l.b16 %v359
    %v444 = vunpack.c.l.b16 %v360
    %v445 = vunpack.c.h.b16 %v360
    %v446 = vunpack.c.l.b16 %v361
    %v447 = vunpack.c.l.b16 %v362
    %v448 = vunpack.c.h.b16 %v362
    %v449 = vunpack.c.l.b16 %v363
    %v450 = vunpack.c.l.b16 %v364
    %v451 = vunpack.c.h.b16 %v364
    %v452 = vunpack.c.l.b16 %v365
    %v453 = vunpack.c.l.b16 %v366
    %v454 = vunpack.c.h.b16 %v366
    %v455 = vunpack.c.l.b16 %v367
    %v456 = vpack.c.b16 %v411, %v408
    %v457 = vpack.c.b16 %v412, %v409
    %v458 = vpack.c.b16 %v413, %v410
    %v459 = vpack.c.b16 %v417, %v414
    %v460 = vpack.c.b16 %v418, %v415
    %v461 = vpack.c.b16 %v419, %v416
    %v462 = vpack.c.b16 %v423, %v420
    %v463 = vpack.c.b16 %v424, %v421
    %v464 = vpack.c.b16 %v425, %v422
    %v465 = vpack.c.b16 %v429, %v426
    %v466 = vpack.c.b16 %v430, %v427
    %v467 = vpack.c.b16 %v431, %v428
    %v468 = vpack.c.b16 %v435, %v432
    %v469 = vpack.c.b16 %v436, %v433
    %v470 = vpack.c.b16 %v437, %v434
    %v471 = vpack.c.b16 %v441, %v438
    %v472 = vpack.c.b16 %v442, %v439
    %v473 = vpack.c.b16 %v443, %v440
    %v474 = vpack.c.b16 %v447, %v444
    %v475 = vpack.c.b16 %v448, %v445
    %v476 = vpack.c.b16 %v449, %v446
    %v477 = vpack.c.b16 %v453, %v450
    %v478 = vpack.c.b16 %v454, %v451
    %v479 = vpack.c.b16 %v455, %v452
    %504 = vmatpush.bf16.msra.mxu0 %v477
    %505 = vmatpush.bf16.msra.mxu0 %v474
    %506 = vmatpush.bf16.msra.mxu0 %v471
    %507 = vmatpush.bf16.msra.mxu0 %v468
    %508 = vmatpush.bf16.msra.mxu0 %v465
    %509 = vmatpush.bf16.msra.mxu0 %v462
    %510 = vmatpush.bf16.msra.mxu0 %v459
    %511 = vmatpush.bf16.msra.mxu0 %v456
    %512 = vmatmul.bf16.gmra.mxu0 %v335
    %v513 = vpop.f32.mrf.mxu0
    %v514 = vadd.f32 %v370, %v513
    %v515 = vpop.f32.mrf.mxu0
    %516 = vdwg.mxu0
    %517 = vmatpush.bf16.msra.mxu0 %v478
    %518 = vmatpush.bf16.msra.mxu0 %v475
    %519 = vmatpush.bf16.msra.mxu0 %v472
    %520 = vmatpush.bf16.msra.mxu0 %v469
    %521 = vmatpush.bf16.msra.mxu0 %v466
    %522 = vmatpush.bf16.msra.mxu0 %v463
    %523 = vmatpush.bf16.msra.mxu0 %v460
    %524 = vmatpush.bf16.msra.mxu0 %v457
    %525 = vmatmul.bf16.gmra.mxu0 %v335
    %v526 = vpop.f32.mrf.mxu0
    %v527 = vadd.f32 %v371, %v526
    %v528 = vpop.f32.mrf.mxu0
    %529 = vdwg.mxu0
    %530 = vmatpush.bf16.msra.mxu0 %v479
    %531 = vmatpush.bf16.msra.mxu0 %v476
    %532 = vmatpush.bf16.msra.mxu0 %v473
    %533 = vmatpush.bf16.msra.mxu0 %v470
    %534 = vmatpush.bf16.msra.mxu0 %v467
    %535 = vmatpush.bf16.msra.mxu0 %v464
    %536 = vmatpush.bf16.msra.mxu0 %v461
    %537 = vmatpush.bf16.msra.mxu0 %v458
    %538 = vmatmul.bf16.gmra.mxu0 %v335
    %v539 = vpop.f32.mrf.mxu0
    %v540 = vadd.f32 %v372, %v539
    %v541 = vpop.f32.mrf.mxu0
    %542 = vdwg.mxu0
    %v543 = vpack.c.bf16 %v332, %v332
    %v544 = vld [vmem:[#allocation11] sm:$0xff]
    %v545 = vld [vmem:[#allocation11 + $0x8] sm:$0xf]
    %v546 = vld [vmem:[#allocation11 + $0xc] sm:$0xff]
    %v547 = vld [vmem:[#allocation11 + $0x14] sm:$0xf]
    %v548 = vld [vmem:[#allocation11 + $0x18] sm:$0xff]
    %v549 = vld [vmem:[#allocation11 + $0x20] sm:$0xf]
    %v550 = vld [vmem:[#allocation11 + $0x24] sm:$0xff]
    %v551 = vld [vmem:[#allocation11 + $0x2c] sm:$0xf]
    %v552 = vld [vmem:[#allocation11 + $0x30] sm:$0xff]
    %v553 = vld [vmem:[#allocation11 + $0x38] sm:$0xf]
    %v554 = vld [vmem:[#allocation11 + $0x3c] sm:$0xff]
    %v555 = vld [vmem:[#allocation11 + $0x44] sm:$0xf]
    %v556 = vld [vmem:[#allocation11 + $0x48] sm:$0xff]
    %v557 = vld [vmem:[#allocation11 + $0x50] sm:$0xf]
    %v558 = vld [vmem:[#allocation11 + $0x54] sm:$0xff]
    %v559 = vld [vmem:[#allocation11 + $0x5c] sm:$0xf]
    %v560 = vld [vmem:[#allocation11 + $0x60] sm:$0xff]
    %v561 = vld [vmem:[#allocation11 + $0x68] sm:$0xf]
    %v562 = vld [vmem:[#allocation11 + $0x6c] sm:$0xff]
    %v563 = vld [vmem:[#allocation11 + $0x74] sm:$0xf]
    %v564 = vld [vmem:[#allocation11 + $0x78] sm:$0xff]
    %v565 = vld [vmem:[#allocation11 + $0x80] sm:$0xf]
    %v566 = vld [vmem:[#allocation11 + $0x84] sm:$0xff]
    %v567 = vld [vmem:[#allocation11 + $0x8c] sm:$0xf]
    %v568 = vld [vmem:[#allocation11 + $0x90] sm:$0xff]
    %v569 = vld [vmem:[#allocation11 + $0x98] sm:$0xf]
    %v570 = vld [vmem:[#allocation11 + $0x9c] sm:$0xff]
    %v571 = vld [vmem:[#allocation11 + $0xa4] sm:$0xf]
    %v572 = vld [vmem:[#allocation11 + $0xa8] sm:$0xff]
    %v573 = vld [vmem:[#allocation11 + $0xb0] sm:$0xf]
    %v574 = vld [vmem:[#allocation11 + $0xb4] sm:$0xff]
    %v575 = vld [vmem:[#allocation11 + $0xbc] sm:$0xf]
    %v576 = vld [vmem:[#allocation14] sm:$0x7]
    %v578 = vperm.slane %v576, 0
    %v579 = vperm.slane %v576, 1
    %v580 = vperm.slane %v576, 2
    %v616 = vunpack.c.l.b16 %v544
    %v617 = vunpack.c.h.b16 %v544
    %v618 = vunpack.c.l.b16 %v545
    %v619 = vunpack.c.l.b16 %v546
    %v620 = vunpack.c.h.b16 %v546
    %v621 = vunpack.c.l.b16 %v547
    %v622 = vunpack.c.l.b16 %v548
    %v623 = vunpack.c.h.b16 %v548
    %v624 = vunpack.c.l.b16 %v549
    %v625 = vunpack.c.l.b16 %v550
    %v626 = vunpack.c.h.b16 %v550
    %v627 = vunpack.c.l.b16 %v551
    %v628 = vunpack.c.l.b16 %v552
    %v629 = vunpack.c.h.b16 %v552
    %v630 = vunpack.c.l.b16 %v553
    %v631 = vunpack.c.l.b16 %v554
    %v632 = vunpack.c.h.b16 %v554
    %v633 = vunpack.c.l.b16 %v555
    %v634 = vunpack.c.l.b16 %v556
    %v635 = vunpack.c.h.b16 %v556
    %v636 = vunpack.c.l.b16 %v557
    %v637 = vunpack.c.l.b16 %v558
    %v638 = vunpack.c.h.b16 %v558
    %v639 = vunpack.c.l.b16 %v559
    %v640 = vunpack.c.l.b16 %v560
    %v641 = vunpack.c.h.b16 %v560
    %v642 = vunpack.c.l.b16 %v561
    %v643 = vunpack.c.l.b16 %v562
    %v644 = vunpack.c.h.b16 %v562
    %v645 = vunpack.c.l.b16 %v563
    %v646 = vunpack.c.l.b16 %v564
    %v647 = vunpack.c.h.b16 %v564
    %v648 = vunpack.c.l.b16 %v565
    %v649 = vunpack.c.l.b16 %v566
    %v650 = vunpack.c.h.b16 %v566
    %v651 = vunpack.c.l.b16 %v567
    %v652 = vunpack.c.l.b16 %v568
    %v653 = vunpack.c.h.b16 %v568
    %v654 = vunpack.c.l.b16 %v569
    %v655 = vunpack.c.l.b16 %v570
    %v656 = vunpack.c.h.b16 %v570
    %v657 = vunpack.c.l.b16 %v571
    %v658 = vunpack.c.l.b16 %v572
    %v659 = vunpack.c.h.b16 %v572
    %v660 = vunpack.c.l.b16 %v573
    %v661 = vunpack.c.l.b16 %v574
    %v662 = vunpack.c.h.b16 %v574
    %v663 = vunpack.c.l.b16 %v575
    %v664 = vpack.c.b16 %v619, %v616
    %v665 = vpack.c.b16 %v620, %v617
    %v666 = vpack.c.b16 %v621, %v618
    %v667 = vpack.c.b16 %v625, %v622
    %v668 = vpack.c.b16 %v626, %v623
    %v669 = vpack.c.b16 %v627, %v624
    %v670 = vpack.c.b16 %v631, %v628
    %v671 = vpack.c.b16 %v632, %v629
    %v672 = vpack.c.b16 %v633, %v630
    %v673 = vpack.c.b16 %v637, %v634
    %v674 = vpack.c.b16 %v638, %v635
    %v675 = vpack.c.b16 %v639, %v636
    %v676 = vpack.c.b16 %v643, %v640
    %v677 = vpack.c.b16 %v644, %v641
    %v678 = vpack.c.b16 %v645, %v642
    %v679 = vpack.c.b16 %v649, %v646
    %v680 = vpack.c.b16 %v650, %v647
    %v681 = vpack.c.b16 %v651, %v648
    %v682 = vpack.c.b16 %v655, %v652
    %v683 = vpack.c.b16 %v656, %v653
    %v684 = vpack.c.b16 %v657, %v654
    %v685 = vpack.c.b16 %v661, %v658
    %v686 = vpack.c.b16 %v662, %v659
    %v687 = vpack.c.b16 %v663, %v660
    %712 = vmatpush.bf16.msra.mxu0 %v685
    %713 = vmatpush.bf16.msra.mxu0 %v682
    %714 = vmatpush.bf16.msra.mxu0 %v679
    %715 = vmatpush.bf16.msra.mxu0 %v676
    %716 = vmatpush.bf16.msra.mxu0 %v673
    %717 = vmatpush.bf16.msra.mxu0 %v670
    %718 = vmatpush.bf16.msra.mxu0 %v667
    %719 = vmatpush.bf16.msra.mxu0 %v664
    %720 = vmatmul.bf16.gmra.mxu0 %v543
    %v721 = vpop.f32.mrf.mxu0
    %v722 = vadd.f32 %v578, %v721
    %v723 = vpop.f32.mrf.mxu0
    %724 = vdwg.mxu0
    %725 = vmatpush.bf16.msra.mxu0 %v686
    %726 = vmatpush.bf16.msra.mxu0 %v683
    %727 = vmatpush.bf16.msra.mxu0 %v680
    %728 = vmatpush.bf16.msra.mxu0 %v677
    %729 = vmatpush.bf16.msra.mxu0 %v674
    %730 = vmatpush.bf16.msra.mxu0 %v671
    %731 = vmatpush.bf16.msra.mxu0 %v668
    %732 = vmatpush.bf16.msra.mxu0 %v665
    %733 = vmatmul.bf16.gmra.mxu0 %v543
    %v734 = vpop.f32.mrf.mxu0
    %v735 = vadd.f32 %v579, %v734
    %v736 = vpop.f32.mrf.mxu0
    %737 = vdwg.mxu0
    %738 = vmatpush.bf16.msra.mxu0 %v687
    %739 = vmatpush.bf16.msra.mxu0 %v684
    %740 = vmatpush.bf16.msra.mxu0 %v681
    %741 = vmatpush.bf16.msra.mxu0 %v678
    %742 = vmatpush.bf16.msra.mxu0 %v675
    %743 = vmatpush.bf16.msra.mxu0 %v672
    %744 = vmatpush.bf16.msra.mxu0 %v669
    %745 = vmatpush.bf16.msra.mxu0 %v666
    %746 = vmatmul.bf16.gmra.mxu0 %v543
    %v747 = vpop.f32.mrf.mxu0
    %v748 = vadd.f32 %v580, %v747
    %v749 = vpop.f32.mrf.mxu0
    %750 = vdwg.mxu0
    %v751 = vadd.f32 %v514, %v722
    %v752 = vxor.u32 %v751, 2147483648
    %v753 = vmul.f32 %v752, 1.442695
    %v754 = vpow.pop %v753
    %v755 = vadd.f32 %v754, 1.0
    %v756 = vrcp.pop %v755
    %v757 = vmul.f32 %v755, %v756
    %v758 = vsub.f32 1.0, %v757
    %v759 = vmul.f32 %v756, %v758
    %v760 = vadd.f32 %v756, %v759
    %vm761 = vweird.f32 %v755
    %vm762 = vweird.f32 %v756
    %vm763 = vmor %vm761, %vm762
    %v764 = vsel %vm763, %v756, %v760
    %v765 = vand.u32 2147483647, %v755
    %vm766 = vcmp.eq.f32.partialorder %v765, 8.507059e+37
    %v767 = vand.u32 %v755, 2147483648
    %v768 = vor.u32 1.1754944e-38, %v767
    %v769 = vsel %vm766, %v768, %v764
    %v770 = vmul.f32 1.0, %v769
    %v771 = vadd.f32 %v527, %v735
    %v772 = vxor.u32 %v771, 2147483648
    %v773 = vmul.f32 %v772, 1.442695
    %v774 = vpow.pop %v773
    %v775 = vadd.f32 %v774, 1.0
    %v776 = vrcp.pop %v775
    %v777 = vmul.f32 %v775, %v776
    %v778 = vsub.f32 1.0, %v777
    %v779 = vmul.f32 %v776, %v778
    %v780 = vadd.f32 %v776, %v779
    %vm781 = vweird.f32 %v775
    %vm782 = vweird.f32 %v776
    %vm783 = vmor %vm781, %vm782
    %v784 = vsel %vm783, %v776, %v780
    %v785 = vand.u32 2147483647, %v775
    %vm786 = vcmp.eq.f32.partialorder %v785, 8.507059e+37
    %v787 = vand.u32 %v775, 2147483648
    %v788 = vor.u32 1.1754944e-38, %v787
    %v789 = vsel %vm786, %v788, %v784
    %v790 = vmul.f32 1.0, %v789
    %v791 = vmul.f32 %v770, %v748
    %v792 = vadd.f32 %v540, %v791
    %v793 = vtanh.pop %v792
    %v794 = vsub.f32 1.0, %v790
    %v795 = vmul.f32 %v794, %v793
    %v796 = vmul.f32 %v790, %v332
    %v797 = vadd.f32 %v795, %v796
    %798 = vst [vmem:[#allocation21] sm:$0xff] %v797
    %v799 = vpack.c.bf16 %v797, %v797
    %s800 = scalar_lea.vmem [#allocation9], 192
    %v801 = vld [vmem:[%s800] sm:$0xff]
    %v802 = vld [vmem:[%s800 + $0x8] sm:$0xf]
    %v803 = vld [vmem:[%s800 + $0xc] sm:$0xff]
    %v804 = vld [vmem:[%s800 + $0x14] sm:$0xf]
    %v805 = vld [vmem:[%s800 + $0x18] sm:$0xff]
    %v806 = vld [vmem:[%s800 + $0x20] sm:$0xf]
    %v807 = vld [vmem:[%s800 + $0x24] sm:$0xff]
    %v808 = vld [vmem:[%s800 + $0x2c] sm:$0xf]
    %v809 = vld [vmem:[%s800 + $0x30] sm:$0xff]
    %v810 = vld [vmem:[%s800 + $0x38] sm:$0xf]
    %v811 = vld [vmem:[%s800 + $0x3c] sm:$0xff]
    %v812 = vld [vmem:[%s800 + $0x44] sm:$0xf]
    %v813 = vld [vmem:[%s800 + $0x48] sm:$0xff]
    %v814 = vld [vmem:[%s800 + $0x50] sm:$0xf]
    %v815 = vld [vmem:[%s800 + $0x54] sm:$0xff]
    %v816 = vld [vmem:[%s800 + $0x5c] sm:$0xf]
    %v817 = vld [vmem:[%s800 + $0x60] sm:$0xff]
    %v818 = vld [vmem:[%s800 + $0x68] sm:$0xf]
    %v819 = vld [vmem:[%s800 + $0x6c] sm:$0xff]
    %v820 = vld [vmem:[%s800 + $0x74] sm:$0xf]
    %v821 = vld [vmem:[%s800 + $0x78] sm:$0xff]
    %v822 = vld [vmem:[%s800 + $0x80] sm:$0xf]
    %v823 = vld [vmem:[%s800 + $0x84] sm:$0xff]
    %v824 = vld [vmem:[%s800 + $0x8c] sm:$0xf]
    %v825 = vld [vmem:[%s800 + $0x90] sm:$0xff]
    %v826 = vld [vmem:[%s800 + $0x98] sm:$0xf]
    %v827 = vld [vmem:[%s800 + $0x9c] sm:$0xff]
    %v828 = vld [vmem:[%s800 + $0xa4] sm:$0xf]
    %v829 = vld [vmem:[%s800 + $0xa8] sm:$0xff]
    %v830 = vld [vmem:[%s800 + $0xb0] sm:$0xf]
    %v831 = vld [vmem:[%s800 + $0xb4] sm:$0xff]
    %v832 = vld [vmem:[%s800 + $0xbc] sm:$0xf]
    %s833 = scalar_lea.vmem [#allocation12], 3
    %v834 = vld [vmem:[%s833] sm:$0x7]
    %v836 = vperm.slane %v834, 0
    %v837 = vperm.slane %v834, 1
    %v838 = vperm.slane %v834, 2
    %v874 = vunpack.c.l.b16 %v801
    %v875 = vunpack.c.h.b16 %v801
    %v876 = vunpack.c.l.b16 %v802
    %v877 = vunpack.c.l.b16 %v803
    %v878 = vunpack.c.h.b16 %v803
    %v879 = vunpack.c.l.b16 %v804
    %v880 = vunpack.c.l.b16 %v805
    %v881 = vunpack.c.h.b16 %v805
    %v882 = vunpack.c.l.b16 %v806
    %v883 = vunpack.c.l.b16 %v807
    %v884 = vunpack.c.h.b16 %v807
    %v885 = vunpack.c.l.b16 %v808
    %v886 = vunpack.c.l.b16 %v809
    %v887 = vunpack.c.h.b16 %v809
    %v888 = vunpack.c.l.b16 %v810
    %v889 = vunpack.c.l.b16 %v811
    %v890 = vunpack.c.h.b16 %v811
    %v891 = vunpack.c.l.b16 %v812
    %v892 = vunpack.c.l.b16 %v813
    %v893 = vunpack.c.h.b16 %v813
    %v894 = vunpack.c.l.b16 %v814
    %v895 = vunpack.c.l.b16 %v815
    %v896 = vunpack.c.h.b16 %v815
    %v897 = vunpack.c.l.b16 %v816
    %v898 = vunpack.c.l.b16 %v817
    %v899 = vunpack.c.h.b16 %v817
    %v900 = vunpack.c.l.b16 %v818
    %v901 = vunpack.c.l.b16 %v819
    %v902 = vunpack.c.h.b16 %v819
    %v903 = vunpack.c.l.b16 %v820
    %v904 = vunpack.c.l.b16 %v821
    %v905 = vunpack.c.h.b16 %v821
    %v906 = vunpack.c.l.b16 %v822
    %v907 = vunpack.c.l.b16 %v823
    %v908 = vunpack.c.h.b16 %v823
    %v909 = vunpack.c.l.b16 %v824
    %v910 = vunpack.c.l.b16 %v825
    %v911 = vunpack.c.h.b16 %v825
    %v912 = vunpack.c.l.b16 %v826
    %v913 = vunpack.c.l.b16 %v827
    %v914 = vunpack.c.h.b16 %v827
    %v915 = vunpack.c.l.b16 %v828
    %v916 = vunpack.c.l.b16 %v829
    %v917 = vunpack.c.h.b16 %v829
    %v918 = vunpack.c.l.b16 %v830
    %v919 = vunpack.c.l.b16 %v831
    %v920 = vunpack.c.h.b16 %v831
    %v921 = vunpack.c.l.b16 %v832
    %v922 = vpack.c.b16 %v877, %v874
    %v923 = vpack.c.b16 %v878, %v875
    %v924 = vpack.c.b16 %v879, %v876
    %v925 = vpack.c.b16 %v883, %v880
    %v926 = vpack.c.b16 %v884, %v881
    %v927 = vpack.c.b16 %v885, %v882
    %v928 = vpack.c.b16 %v889, %v886
    %v929 = vpack.c.b16 %v890, %v887
    %v930 = vpack.c.b16 %v891, %v888
    %v931 = vpack.c.b16 %v895, %v892
    %v932 = vpack.c.b16 %v896, %v893
    %v933 = vpack.c.b16 %v897, %v894
    %v934 = vpack.c.b16 %v901, %v898
    %v935 = vpack.c.b16 %v902, %v899
    %v936 = vpack.c.b16 %v903, %v900
    %v937 = vpack.c.b16 %v907, %v904
    %v938 = vpack.c.b16 %v908, %v905
    %v939 = vpack.c.b16 %v909, %v906
    %v940 = vpack.c.b16 %v913, %v910
    %v941 = vpack.c.b16 %v914, %v911
    %v942 = vpack.c.b16 %v915, %v912
    %v943 = vpack.c.b16 %v919, %v916
    %v944 = vpack.c.b16 %v920, %v917
    %v945 = vpack.c.b16 %v921, %v918
    %970 = vmatpush.bf16.msra.mxu0 %v943
    %971 = vmatpush.bf16.msra.mxu0 %v940
    %972 = vmatpush.bf16.msra.mxu0 %v937
    %973 = vmatpush.bf16.msra.mxu0 %v934
    %974 = vmatpush.bf16.msra.mxu0 %v931
    %975 = vmatpush.bf16.msra.mxu0 %v928
    %976 = vmatpush.bf16.msra.mxu0 %v925
    %977 = vmatpush.bf16.msra.mxu0 %v922
    %978 = vmatmul.bf16.gmra.mxu0 %v799
    %v979 = vpop.f32.mrf.mxu0
    %v980 = vadd.f32 %v836, %v979
    %v981 = vpop.f32.mrf.mxu0
    %982 = vdwg.mxu0
    %983 = vmatpush.bf16.msra.mxu0 %v944
    %984 = vmatpush.bf16.msra.mxu0 %v941
    %985 = vmatpush.bf16.msra.mxu0 %v938
    %986 = vmatpush.bf16.msra.mxu0 %v935
    %987 = vmatpush.bf16.msra.mxu0 %v932
    %988 = vmatpush.bf16.msra.mxu0 %v929
    %989 = vmatpush.bf16.msra.mxu0 %v926
    %990 = vmatpush.bf16.msra.mxu0 %v923
    %991 = vmatmul.bf16.gmra.mxu0 %v799
    %v992 = vpop.f32.mrf.mxu0
    %v993 = vadd.f32 %v837, %v992
    %v994 = vpop.f32.mrf.mxu0
    %995 = vdwg.mxu0
    %996 = vmatpush.bf16.msra.mxu0 %v945
    %997 = vmatpush.bf16.msra.mxu0 %v942
    %998 = vmatpush.bf16.msra.mxu0 %v939
    %999 = vmatpush.bf16.msra.mxu0 %v936
    %1000 = vmatpush.bf16.msra.mxu0 %v933
    %1001 = vmatpush.bf16.msra.mxu0 %v930
    %1002 = vmatpush.bf16.msra.mxu0 %v927
    %1003 = vmatpush.bf16.msra.mxu0 %v924
    %1004 = vmatmul.bf16.gmra.mxu0 %v799
    %v1005 = vpop.f32.mrf.mxu0
    %v1006 = vadd.f32 %v838, %v1005
    %v1007 = vpop.f32.mrf.mxu0
    %1008 = vdwg.mxu0
    %v1009 = vpack.c.bf16 %v333, %v333
    %s1010 = scalar_lea.vmem [#allocation11], 192
    %v1011 = vld [vmem:[%s1010] sm:$0xff]
    %v1012 = vld [vmem:[%s1010 + $0x8] sm:$0xf]
    %v1013 = vld [vmem:[%s1010 + $0xc] sm:$0xff]
    %v1014 = vld [vmem:[%s1010 + $0x14] sm:$0xf]
    %v1015 = vld [vmem:[%s1010 + $0x18] sm:$0xff]
    %v1016 = vld [vmem:[%s1010 + $0x20] sm:$0xf]
    %v1017 = vld [vmem:[%s1010 + $0x24] sm:$0xff]
    %v1018 = vld [vmem:[%s1010 + $0x2c] sm:$0xf]
    %v1019 = vld [vmem:[%s1010 + $0x30] sm:$0xff]
    %v1020 = vld [vmem:[%s1010 + $0x38] sm:$0xf]
    %v1021 = vld [vmem:[%s1010 + $0x3c] sm:$0xff]
    %v1022 = vld [vmem:[%s1010 + $0x44] sm:$0xf]
    %v1023 = vld [vmem:[%s1010 + $0x48] sm:$0xff]
    %v1024 = vld [vmem:[%s1010 + $0x50] sm:$0xf]
    %v1025 = vld [vmem:[%s1010 + $0x54] sm:$0xff]
    %v1026 = vld [vmem:[%s1010 + $0x5c] sm:$0xf]
    %v1027 = vld [vmem:[%s1010 + $0x60] sm:$0xff]
    %v1028 = vld [vmem:[%s1010 + $0x68] sm:$0xf]
    %v1029 = vld [vmem:[%s1010 + $0x6c] sm:$0xff]
    %v1030 = vld [vmem:[%s1010 + $0x74] sm:$0xf]
    %v1031 = vld [vmem:[%s1010 + $0x78] sm:$0xff]
    %v1032 = vld [vmem:[%s1010 + $0x80] sm:$0xf]
    %v1033 = vld [vmem:[%s1010 + $0x84] sm:$0xff]
    %v1034 = vld [vmem:[%s1010 + $0x8c] sm:$0xf]
    %v1035 = vld [vmem:[%s1010 + $0x90] sm:$0xff]
    %v1036 = vld [vmem:[%s1010 + $0x98] sm:$0xf]
    %v1037 = vld [vmem:[%s1010 + $0x9c] sm:$0xff]
    %v1038 = vld [vmem:[%s1010 + $0xa4] sm:$0xf]
    %v1039 = vld [vmem:[%s1010 + $0xa8] sm:$0xff]
    %v1040 = vld [vmem:[%s1010 + $0xb0] sm:$0xf]
    %v1041 = vld [vmem:[%s1010 + $0xb4] sm:$0xff]
    %v1042 = vld [vmem:[%s1010 + $0xbc] sm:$0xf]
    %s1043 = scalar_lea.vmem [#allocation14], 3
    %v1044 = vld [vmem:[%s1043] sm:$0x7]
    %v1046 = vperm.slane %v1044, 0
    %v1047 = vperm.slane %v1044, 1
    %v1048 = vperm.slane %v1044, 2
    %v1084 = vunpack.c.l.b16 %v1011
    %v1085 = vunpack.c.h.b16 %v1011
    %v1086 = vunpack.c.l.b16 %v1012
    %v1087 = vunpack.c.l.b16 %v1013
    %v1088 = vunpack.c.h.b16 %v1013
    %v1089 = vunpack.c.l.b16 %v1014
    %v1090 = vunpack.c.l.b16 %v1015
    %v1091 = vunpack.c.h.b16 %v1015
    %v1092 = vunpack.c.l.b16 %v1016
    %v1093 = vunpack.c.l.b16 %v1017
    %v1094 = vunpack.c.h.b16 %v1017
    %v1095 = vunpack.c.l.b16 %v1018
    %v1096 = vunpack.c.l.b16 %v1019
    %v1097 = vunpack.c.h.b16 %v1019
    %v1098 = vunpack.c.l.b16 %v1020
    %v1099 = vunpack.c.l.b16 %v1021
    %v1100 = vunpack.c.h.b16 %v1021
    %v1101 = vunpack.c.l.b16 %v1022
    %v1102 = vunpack.c.l.b16 %v1023
    %v1103 = vunpack.c.h.b16 %v1023
    %v1104 = vunpack.c.l.b16 %v1024
    %v1105 = vunpack.c.l.b16 %v1025
    %v1106 = vunpack.c.h.b16 %v1025
    %v1107 = vunpack.c.l.b16 %v1026
    %v1108 = vunpack.c.l.b16 %v1027
    %v1109 = vunpack.c.h.b16 %v1027
    %v1110 = vunpack.c.l.b16 %v1028
    %v1111 = vunpack.c.l.b16 %v1029
    %v1112 = vunpack.c.h.b16 %v1029
    %v1113 = vunpack.c.l.b16 %v1030
    %v1114 = vunpack.c.l.b16 %v1031
    %v1115 = vunpack.c.h.b16 %v1031
    %v1116 = vunpack.c.l.b16 %v1032
    %v1117 = vunpack.c.l.b16 %v1033
    %v1118 = vunpack.c.h.b16 %v1033
    %v1119 = vunpack.c.l.b16 %v1034
    %v1120 = vunpack.c.l.b16 %v1035
    %v1121 = vunpack.c.h.b16 %v1035
    %v1122 = vunpack.c.l.b16 %v1036
    %v1123 = vunpack.c.l.b16 %v1037
    %v1124 = vunpack.c.h.b16 %v1037
    %v1125 = vunpack.c.l.b16 %v1038
    %v1126 = vunpack.c.l.b16 %v1039
    %v1127 = vunpack.c.h.b16 %v1039
    %v1128 = vunpack.c.l.b16 %v1040
    %v1129 = vunpack.c.l.b16 %v1041
    %v1130 = vunpack.c.h.b16 %v1041
    %v1131 = vunpack.c.l.b16 %v1042
    %v1132 = vpack.c.b16 %v1087, %v1084
    %v1133 = vpack.c.b16 %v1088, %v1085
    %v1134 = vpack.c.b16 %v1089, %v1086
    %v1135 = vpack.c.b16 %v1093, %v1090
    %v1136 = vpack.c.b16 %v1094, %v1091
    %v1137 = vpack.c.b16 %v1095, %v1092
    %v1138 = vpack.c.b16 %v1099, %v1096
    %v1139 = vpack.c.b16 %v1100, %v1097
    %v1140 = vpack.c.b16 %v1101, %v1098
    %v1141 = vpack.c.b16 %v1105, %v1102
    %v1142 = vpack.c.b16 %v1106, %v1103
    %v1143 = vpack.c.b16 %v1107, %v1104
    %v1144 = vpack.c.b16 %v1111, %v1108
    %v1145 = vpack.c.b16 %v1112, %v1109
    %v1146 = vpack.c.b16 %v1113, %v1110
    %v1147 = vpack.c.b16 %v1117, %v1114
    %v1148 = vpack.c.b16 %v1118, %v1115
    %v1149 = vpack.c.b16 %v1119, %v1116
    %v1150 = vpack.c.b16 %v1123, %v1120
    %v1151 = vpack.c.b16 %v1124, %v1121
    %v1152 = vpack.c.b16 %v1125, %v1122
    %v1153 = vpack.c.b16 %v1129, %v1126
    %v1154 = vpack.c.b16 %v1130, %v1127
    %v1155 = vpack.c.b16 %v1131, %v1128
    %1180 = vmatpush.bf16.msra.mxu0 %v1153
    %1181 = vmatpush.bf16.msra.mxu0 %v1150
    %1182 = vmatpush.bf16.msra.mxu0 %v1147
    %1183 = vmatpush.bf16.msra.mxu0 %v1144
    %1184 = vmatpush.bf16.msra.mxu0 %v1141
    %1185 = vmatpush.bf16.msra.mxu0 %v1138
    %1186 = vmatpush.bf16.msra.mxu0 %v1135
    %1187 = vmatpush.bf16.msra.mxu0 %v1132
    %1188 = vmatmul.bf16.gmra.mxu0 %v1009
    %v1189 = vpop.f32.mrf.mxu0
    %v1190 = vadd.f32 %v1046, %v1189
    %v1191 = vpop.f32.mrf.mxu0
    %1192 = vdwg.mxu0
    %1193 = vmatpush.bf16.msra.mxu0 %v1154
    %1194 = vmatpush.bf16.msra.mxu0 %v1151
    %1195 = vmatpush.bf16.msra.mxu0 %v1148
    %1196 = vmatpush.bf16.msra.mxu0 %v1145
    %1197 = vmatpush.bf16.msra.mxu0 %v1142
    %1198 = vmatpush.bf16.msra.mxu0 %v1139
    %1199 = vmatpush.bf16.msra.mxu0 %v1136
    %1200 = vmatpush.bf16.msra.mxu0 %v1133
    %1201 = vmatmul.bf16.gmra.mxu0 %v1009
    %v1202 = vpop.f32.mrf.mxu0
    %v1203 = vadd.f32 %v1047, %v1202
    %v1204 = vpop.f32.mrf.mxu0
    %1205 = vdwg.mxu0
    %1206 = vmatpush.bf16.msra.mxu0 %v1155
    %1207 = vmatpush.bf16.msra.mxu0 %v1152
    %1208 = vmatpush.bf16.msra.mxu0 %v1149
    %1209 = vmatpush.bf16.msra.mxu0 %v1146
    %1210 = vmatpush.bf16.msra.mxu0 %v1143
    %1211 = vmatpush.bf16.msra.mxu0 %v1140
    %1212 = vmatpush.bf16.msra.mxu0 %v1137
    %1213 = vmatpush.bf16.msra.mxu0 %v1134
    %1214 = vmatmul.bf16.gmra.mxu0 %v1009
    %v1215 = vpop.f32.mrf.mxu0
    %v1216 = vadd.f32 %v1048, %v1215
    %v1217 = vpop.f32.mrf.mxu0
    %1218 = vdwg.mxu0
    %v1219 = vadd.f32 %v980, %v1190
    %v1220 = vxor.u32 %v1219, 2147483648
    %v1221 = vmul.f32 %v1220, 1.442695
    %v1222 = vpow.pop %v1221
    %v1223 = vadd.f32 %v1222, 1.0
    %v1224 = vrcp.pop %v1223
    %v1225 = vmul.f32 %v1223, %v1224
    %v1226 = vsub.f32 1.0, %v1225
    %v1227 = vmul.f32 %v1224, %v1226
    %v1228 = vadd.f32 %v1224, %v1227
    %vm1229 = vweird.f32 %v1223
    %vm1230 = vweird.f32 %v1224
    %vm1231 = vmor %vm1229, %vm1230
    %v1232 = vsel %vm1231, %v1224, %v1228
    %v1233 = vand.u32 2147483647, %v1223
    %vm1234 = vcmp.eq.f32.partialorder %v1233, 8.507059e+37
    %v1235 = vand.u32 %v1223, 2147483648
    %v1236 = vor.u32 1.1754944e-38, %v1235
    %v1237 = vsel %vm1234, %v1236, %v1232
    %v1238 = vmul.f32 1.0, %v1237
    %v1239 = vadd.f32 %v993, %v1203
    %v1240 = vxor.u32 %v1239, 2147483648
    %v1241 = vmul.f32 %v1240, 1.442695
    %v1242 = vpow.pop %v1241
    %v1243 = vadd.f32 %v1242, 1.0
    %v1244 = vrcp.pop %v1243
    %v1245 = vmul.f32 %v1243, %v1244
    %v1246 = vsub.f32 1.0, %v1245
    %v1247 = vmul.f32 %v1244, %v1246
    %v1248 = vadd.f32 %v1244, %v1247
    %vm1249 = vweird.f32 %v1243
    %vm1250 = vweird.f32 %v1244
    %vm1251 = vmor %vm1249, %vm1250
    %v1252 = vsel %vm1251, %v1244, %v1248
    %v1253 = vand.u32 2147483647, %v1243
    %vm1254 = vcmp.eq.f32.partialorder %v1253, 8.507059e+37
    %v1255 = vand.u32 %v1243, 2147483648
    %v1256 = vor.u32 1.1754944e-38, %v1255
    %v1257 = vsel %vm1254, %v1256, %v1252
    %v1258 = vmul.f32 1.0, %v1257
    %v1259 = vmul.f32 %v1238, %v1216
    %v1260 = vadd.f32 %v1006, %v1259
    %v1261 = vtanh.pop %v1260
    %v1262 = vsub.f32 1.0, %v1258
    %v1263 = vmul.f32 %v1262, %v1261
    %v1264 = vmul.f32 %v1258, %v333
    %v1265 = vadd.f32 %v1263, %v1264
    %s1266 = scalar_lea.vmem [#allocation21], 8
    %1267 = vst [vmem:[%s1266] sm:$0xff] %v1265
    %v1268 = vpack.c.bf16 %v1265, %v1265
    %v1269 = vld [vmem:[#allocation15] sm:$0xf]
    %v1270 = vld [vmem:[#allocation15 + $0x4] sm:$0xf]
    %v1271 = vld [vmem:[#allocation15 + $0x8] sm:$0xf]
    %v1272 = vld [vmem:[#allocation15 + $0xc] sm:$0xf]
    %v1273 = vld [vmem:[#allocation15 + $0x10] sm:$0xf]
    %v1274 = vld [vmem:[#allocation15 + $0x14] sm:$0xf]
    %v1275 = vld [vmem:[#allocation15 + $0x18] sm:$0xf]
    %v1276 = vld [vmem:[#allocation15 + $0x1c] sm:$0xf]
    %v1277 = vld [vmem:[#allocation15 + $0x20] sm:$0xf]
    %v1278 = vld [vmem:[#allocation15 + $0x24] sm:$0xf]
    %v1279 = vld [vmem:[#allocation15 + $0x28] sm:$0xf]
    %v1280 = vld [vmem:[#allocation15 + $0x2c] sm:$0xf]
    %v1281 = vld [vmem:[#allocation15 + $0x30] sm:$0xf]
    %v1282 = vld [vmem:[#allocation15 + $0x34] sm:$0xf]
    %v1283 = vld [vmem:[#allocation15 + $0x38] sm:$0xf]
    %v1284 = vld [vmem:[#allocation15 + $0x3c] sm:$0xf]
    %v1285 = vld [vmem:[#allocation17] sm:$0x1]
    %v1287 = vperm.slane %v1285, 0
    %v1305 = vunpack.c.l.b16 %v1269
    %v1306 = vunpack.c.l.b16 %v1270
    %v1307 = vunpack.c.l.b16 %v1271
    %v1308 = vunpack.c.l.b16 %v1272
    %v1309 = vunpack.c.l.b16 %v1273
    %v1310 = vunpack.c.l.b16 %v1274
    %v1311 = vunpack.c.l.b16 %v1275
    %v1312 = vunpack.c.l.b16 %v1276
    %v1313 = vunpack.c.l.b16 %v1277
    %v1314 = vunpack.c.l.b16 %v1278
    %v1315 = vunpack.c.l.b16 %v1279
    %v1316 = vunpack.c.l.b16 %v1280
    %v1317 = vunpack.c.l.b16 %v1281
    %v1318 = vunpack.c.l.b16 %v1282
    %v1319 = vunpack.c.l.b16 %v1283
    %v1320 = vunpack.c.l.b16 %v1284
    %v1321 = vpack.c.b16 %v1306, %v1305
    %v1322 = vpack.c.b16 %v1308, %v1307
    %v1323 = vpack.c.b16 %v1310, %v1309
    %v1324 = vpack.c.b16 %v1312, %v1311
    %v1325 = vpack.c.b16 %v1314, %v1313
    %v1326 = vpack.c.b16 %v1316, %v1315
    %v1327 = vpack.c.b16 %v1318, %v1317
    %v1328 = vpack.c.b16 %v1320, %v1319
    %1337 = vmatpush.bf16.msra.mxu0 %v1328
    %1338 = vmatpush.bf16.msra.mxu0 %v1327
    %1339 = vmatpush.bf16.msra.mxu0 %v1326
    %1340 = vmatpush.bf16.msra.mxu0 %v1325
    %1341 = vmatpush.bf16.msra.mxu0 %v1324
    %1342 = vmatpush.bf16.msra.mxu0 %v1323
    %1343 = vmatpush.bf16.msra.mxu0 %v1322
    %1344 = vmatpush.bf16.msra.mxu0 %v1321
    %1345 = vmatmul.bf16.gmra.mxu0 %v1268
    %v1346 = vpop.f32.mrf.mxu0
    %v1347 = vadd.f32 %v1287, %v1346
    %v1348 = vpop.f32.mrf.mxu0
    %1349 = vdwg.mxu0
    %v1350 = vpack.c.bf16 %v1347, %v1347
    %v1351 = vld [vmem:[#allocation18] sm:$0xf]
    %v1352 = vld [vmem:[#allocation18 + $0x4] sm:$0xf]
    %v1353 = vld [vmem:[#allocation18 + $0x8] sm:$0xf]
    %v1354 = vld [vmem:[#allocation18 + $0xc] sm:$0xf]
    %v1355 = vld [vmem:[#allocation18 + $0x10] sm:$0xf]
    %v1356 = vld [vmem:[#allocation18 + $0x14] sm:$0xf]
    %v1357 = vld [vmem:[#allocation18 + $0x18] sm:$0xf]
    %v1358 = vld [vmem:[#allocation18 + $0x1c] sm:$0xf]
    %v1359 = vld [vmem:[#allocation18 + $0x20] sm:$0xf]
    %v1360 = vld [vmem:[#allocation18 + $0x24] sm:$0xf]
    %v1361 = vld [vmem:[#allocation18 + $0x28] sm:$0xf]
    %v1362 = vld [vmem:[#allocation18 + $0x2c] sm:$0xf]
    %v1363 = vld [vmem:[#allocation18 + $0x30] sm:$0xf]
    %v1364 = vld [vmem:[#allocation18 + $0x34] sm:$0xf]
    %v1365 = vld [vmem:[#allocation18 + $0x38] sm:$0xf]
    %v1366 = vld [vmem:[#allocation18 + $0x3c] sm:$0xf]
    %v1367 = vld [vmem:[#allocation20] sm:$0x1]
    %v1369 = vperm.slane %v1367, 0
    %v1387 = vunpack.c.l.b16 %v1351
    %v1388 = vunpack.c.l.b16 %v1352
    %v1389 = vunpack.c.l.b16 %v1353
    %v1390 = vunpack.c.l.b16 %v1354
    %v1391 = vunpack.c.l.b16 %v1355
    %v1392 = vunpack.c.l.b16 %v1356
    %v1393 = vunpack.c.l.b16 %v1357
    %v1394 = vunpack.c.l.b16 %v1358
    %v1395 = vunpack.c.l.b16 %v1359
    %v1396 = vunpack.c.l.b16 %v1360
    %v1397 = vunpack.c.l.b16 %v1361
    %v1398 = vunpack.c.l.b16 %v1362
    %v1399 = vunpack.c.l.b16 %v1363
    %v1400 = vunpack.c.l.b16 %v1364
    %v1401 = vunpack.c.l.b16 %v1365
    %v1402 = vunpack.c.l.b16 %v1366
    %v1403 = vpack.c.b16 %v1388, %v1387
    %v1404 = vpack.c.b16 %v1390, %v1389
    %v1405 = vpack.c.b16 %v1392, %v1391
    %v1406 = vpack.c.b16 %v1394, %v1393
    %v1407 = vpack.c.b16 %v1396, %v1395
    %v1408 = vpack.c.b16 %v1398, %v1397
    %v1409 = vpack.c.b16 %v1400, %v1399
    %v1410 = vpack.c.b16 %v1402, %v1401
    %1419 = vmatpush.bf16.msra.mxu0 %v1410
    %1420 = vmatpush.bf16.msra.mxu0 %v1409
    %1421 = vmatpush.bf16.msra.mxu0 %v1408
    %1422 = vmatpush.bf16.msra.mxu0 %v1407
    %1423 = vmatpush.bf16.msra.mxu0 %v1406
    %1424 = vmatpush.bf16.msra.mxu0 %v1405
    %1425 = vmatpush.bf16.msra.mxu0 %v1404
    %1426 = vmatpush.bf16.msra.mxu0 %v1403
    %1427 = vmatmul.bf16.gmra.mxu0 %v1350
    %v1428 = vpop.f32.mrf.mxu0
    %v1429 = vadd.f32 %v1369, %v1428
    %v1430 = vpop.f32.mrf.mxu0
    %1431 = vdwg.mxu0
    %v1432 = vpack.c.bf16 %v1429, %v1429
    %1433 = vst [vmem:[%s12] sm:$0xf] %v1432
    // Predicated region
    $region106: #{decoder_forward.2} parent=1 // pred_check
      _
    $region107: #{decoder_forward.2} parent=1 // pred_check_branch
      %1435 = sbr.rel (0) target = $region109
    $region108: #{decoder_forward.2} parent=1 // pred_region
      %1437 = vsyncadd [#allocation8], 0
      %s1438 = sshll.u32 [#allocation21], 4
      %s1439 = int_to_ptr.vmem [resolvable:$true] %s1438
      %s1440 = sshll.u32 %s11, 4
      %s1441 = int_to_ptr.hbm [resolvable:$true] %s1440
      %1446 = dma.vmem_to_hbm [thread:$0]  %s1439, 256, %s1441, [#allocation8], 128, 128, 8
    $region109: #{decoder_forward.2} parent=1 // pred_fallthru
      _
    // Predicated region
    $region110: #{decoder_forward.2} parent=1 // pred_check
      _
    $region111: #{decoder_forward.2} parent=1 // pred_check_branch
      %1448 = sbr.rel (0) target = $region113
    $region112: #{decoder_forward.2} parent=1 // pred_region
      _
    $region113: #{decoder_forward.2} parent=1 // pred_fallthru
      _
    // Predicated region
    $region114: #{decoder_forward.2} parent=1 // pred_check
      _
    $region115: #{decoder_forward.2} parent=1 // pred_check_branch
      %1450 = sbr.rel (0) target = $region117
    $region116: #{decoder_forward.2} parent=1 // pred_region
      %1452 = dma.done [#allocation8], 256
    $region117: #{decoder_forward.2} parent=1 // pred_fallthru
      _
    // Predicated region
    $region118: #{decoder_forward.2} parent=1 // pred_check
      _
    $region119: #{decoder_forward.2} parent=1 // pred_check_branch
      %1454 = sbr.rel (0) target = $region121
    $region120: #{decoder_forward.2} parent=1 // pred_region
      _
    $region121: #{decoder_forward.2} parent=1 // pred_fallthru
      _
    %1455 = vsyncpa [#allocation7], 1
    %1456 = vsyncpa [#allocation10], 1
    %1457 = vsyncpa [#allocation13], 1
    %1458 = vsyncpa [#allocation16], 1
    %1459 = vsyncpa [#allocation19], 1
    %1460 = vsyncpa [#allocation8], 1
  %1461 = vsyncmov [#allocation3]
  %s1462 = vpop.sfrf %1461
  %p1463 = scmp.eq.s32.totalorder %s1462, 0
  %p1464 = pneg %p1463
  %1466 = shalt.err (%p1464)
  %s1467 = scalar_lea.sflag [#allocation3], 1
  %1468 = vsyncmov %s1467
  %s1469 = vpop.sfrf %1468
  %p1470 = scmp.eq.s32.totalorder %s1469, 0
  %p1471 = pneg %p1470
  %1473 = shalt.err (%p1471)
  %s1474 = scalar_lea.sflag [#allocation3], 2
  %1475 = vsyncmov %s1474
  %s1476 = vpop.sfrf %1475
  %p1477 = scmp.eq.s32.totalorder %s1476, 0
  %p1478 = pneg %p1477
  %1480 = shalt.err (%p1478)
  %s1481 = scalar_lea.sflag [#allocation3], 3
  %1482 = vsyncmov %s1481
  %s1483 = vpop.sfrf %1482
  %p1484 = scmp.eq.s32.totalorder %s1483, 0
  %p1485 = pneg %p1484
  %1487 = shalt.err (%p1485)
  %s1488 = scalar_lea.sflag [#allocation3], 4
  %1489 = vsyncmov %s1488
  %s1490 = vpop.sfrf %1489
  %p1491 = scmp.eq.s32.totalorder %s1490, 0
  %p1492 = pneg %p1491
  %1494 = shalt.err (%p1492)
  %s1495 = scalar_lea.sflag [#allocation3], 5
  %1496 = vsyncmov %s1495
  %s1497 = vpop.sfrf %1496
  %p1498 = scmp.eq.s32.totalorder %s1497, 0
  %p1499 = pneg %p1498
  %1501 = shalt.err (%p1499)
  %s1502 = scalar_lea.sflag [#allocation3], 6
  %1503 = vsyncmov %s1502
  %s1504 = vpop.sfrf %1503
  %p1505 = scmp.eq.s32.totalorder %s1504, 0
  %p1506 = pneg %p1505
  %1508 = shalt.err (%p1506)
  %s1509 = scalar_lea.sflag [#allocation3], 7
  %1510 = vsyncmov %s1509
  %s1511 = vpop.sfrf %1510
  %p1512 = scmp.eq.s32.totalorder %s1511, 0
  %p1513 = pneg %p1512
  %1515 = shalt.err (%p1513)

</llo_original>
